<compile_context>
chip_gen: v7x
topology: tpu7x:2x2x1
jax: 0.10.0
libtpu: 0.0.40
codegen_flags: <defaults>
</compile_context>

<pallas_src>
import functools

import jax
import jax.numpy as jnp
from jax import lax
from jax.experimental import pallas as pl
from jax.experimental.pallas import tpu as pltpu


def autopad(k, p=None):
    if p is None:
        p = k // 2 if isinstance(k, int) else [x // 2 for x in k]
    return p


def _round_up(x, m):
    return ((x + m - 1) // m) * m


def _vmem_cap_bytes():
    """Physical VMEM per core (v5e/v6e: 128 MiB, v7x: 64 MiB)."""
    try:
        cap = int(pltpu.get_tpu_info().vmem_capacity_bytes)
        if cap > 0:
            return cap
    except Exception:
        pass
    return 64 * 1024 * 1024   # conservative fallback (v7x per-TensorCore VMEM)


def _step_vmem_bytes(th, wo, w_eff, cin, c2t, kp):
    """Approximate per-grid-step VMEM footprint (double-buffered blocks + temps)."""
    halo = kp - 1
    x_blk = (th + halo) * w_eff * cin * 2          # bf16 input window
    o_blk = th * wo * c2t * 2                      # bf16 output tile
    w_blk = kp * kp * cin * c2t * 2                # bf16 weight tile
    sb_blk = 2 * c2t * 4 * 2                       # f32 scale + bias
    acc = th * wo * c2t * 4                        # f32 accumulator / epilogue
    patch = th * wo * kp * cin * 2                 # bf16 per-kh window
    return 2 * (x_blk + o_blk + w_blk + sb_blk) + acc + patch


def _pick_block_h(Ho, Wo, w_eff, cin, c2t, kp, budget_bytes, target_pix=8192):
    """Row-tile height: ~target_pix output pixels per step, capped by VMEM budget."""
    th = min(Ho, max(8, -(-target_pix // max(Wo, 1))))
    while th > 8 and _step_vmem_bytes(th, Wo, w_eff, cin, c2t, kp) > budget_bytes:
        th -= 8
    return max(1, min(th, Ho))


# --------------------------------------------------------------------------- #
# Kernel body (stride-1 only; stride handled by wrapper space-to-depth).
# --------------------------------------------------------------------------- #
def _conv_kernel(x_ref, w_ref, scale_ref, bias_ref, o_ref, *, kp, th, wo, per_tap):
    # x_ref:     (1, th + kp - 1, W_eff, Cin)  bf16 overlapping input row window
    # w_ref:     (kp, kp*Cin, C2t) bf16        [per-kh layout, Cin < 128]   or
    #            (kp*kp, Cin, C2t) bf16        [per-tap layout, Cin >= 128]
    # scale_ref: (1, C2t) f32   folded BN scale (eval mode)
    # bias_ref:  (1, C2t) f32   folded BN bias
    # o_ref:     (1, th, Wo, C2t) bf16
    dn = (((2,), (0,)), ((), ()))   # contract window depth against weight rows
    acc = None
    if per_tap:
        # k*k partial matmuls of contraction depth Cin (>=128 keeps the MXU fed).
        for kh in range(kp):
            for kw in range(kp):
                win = x_ref[0, kh:kh + th, kw:kw + wo, :]
                t = lax.dot_general(win, w_ref[kh * kp + kw], dn,
                                    preferred_element_type=jnp.float32)
                acc = t if acc is None else acc + t
    else:
        # kp partial matmuls of contraction depth kp*Cin (per-kh accumulation);
        # the per-kh window is ~1/kp the size of a full k*k im2col patch.
        for kh in range(kp):
            wins = [x_ref[0, kh:kh + th, kw:kw + wo, :] for kw in range(kp)]
            patch = wins[0] if kp == 1 else jnp.concatenate(wins, axis=-1)
            t = lax.dot_general(patch, w_ref[kh], dn,
                                preferred_element_type=jnp.float32)
            acc = t if acc is None else acc + t

    y = acc * scale_ref[0] + bias_ref[0]   # BatchNorm (folded, eval mode), f32
    y = y * jax.nn.sigmoid(y)              # SiLU, f32
    o_ref[0] = y.astype(o_ref.dtype)       # store bf16


# --------------------------------------------------------------------------- #
# NHWC wrapper (production path — keep NHWC bf16 between layers)
# --------------------------------------------------------------------------- #
def conv_bn_silu_nhwc(x_nhwc, weight_oihw, gamma, beta, running_mean, running_var,
                      *, k=1, s=1, p=None, eps=1e-3, block_h=None):
    p = autopad(k, p)
    N, H, W, C1 = x_nhwc.shape
    C2 = weight_oihw.shape[0]
    Ho = (H + 2 * p - k) // s + 1
    Wo = (W + 2 * p - k) // s + 1

    # ---- channel tiling: lane-dense output, 256-wide C2 tiles when possible
    C2p = _round_up(C2, 128)
    c2t = 256 if C2p % 256 == 0 else 128
    n_c2 = C2p // c2t

    # ---- fold BatchNorm (inference) into per-channel scale / bias
    inv_std = 1.0 / jnp.sqrt(running_var.astype(jnp.float32) + eps)
    scale = gamma.astype(jnp.float32) * inv_std
    bias = beta.astype(jnp.float32) - running_mean.astype(jnp.float32) * scale
    scale = jnp.pad(scale, (0, C2p - C2)).reshape(1, C2p)
    bias = jnp.pad(bias, (0, C2p - C2)).reshape(1, C2p)

    # ---- weights OIHW -> (kp, kp, cin, C2p); stride folded via space-to-depth
    w_khwc = jnp.transpose(weight_oihw, (2, 3, 1, 0)).astype(jnp.float32)
    if s == 1:
        kp, cin = k, C1
        w4 = w_khwc
    else:
        kp = -(-k // s)                    # ceil(k / s)
        cin = s * s * C1
        w_full = jnp.zeros((kp * s, kp * s, C1, C2), jnp.float32)
        w_full = w_full.at[:k, :k].set(w_khwc)
        w4 = (w_full.reshape(kp, s, kp, s, C1, C2)
              .transpose(0, 2, 1, 3, 4, 5)
              .reshape(kp, kp, cin, C2))
    w4 = jnp.pad(w4, ((0, 0), (0, 0), (0, 0), (0, C2p - C2))).astype(jnp.bfloat16)
    per_tap = cin >= 128
    if per_tap:
        w_op = w4.reshape(kp * kp, cin, C2p)
        w_block = (kp * kp, cin, c2t)
    else:
        w_op = w4.reshape(kp, kp * cin, C2p)
        w_block = (kp, kp * cin, c2t)

    halo = kp - 1
    w_eff = Wo + kp - 1

    # ---- row tiling sized from the per-generation VMEM budget
    cap = _vmem_cap_bytes()
    if block_h is None:
        th = _pick_block_h(Ho, Wo, w_eff, cin, c2t, kp, budget_bytes=int(0.45 * cap))
    else:
        th = max(1, min(int(block_h), Ho))
    n_h = -(-Ho // th)
    ho_pad = n_h * th
    h_eff = ho_pad + halo

    # ---- activations: bf16 NHWC, zero pad, space-to-depth for s > 1
    x = x_nhwc.astype(jnp.bfloat16)
    if s == 1:
        pad_b = max(0, h_eff - (H + 2 * p))
        pad_r = max(0, w_eff - (W + 2 * p))
        x_eff = jnp.pad(x, ((0, 0), (p, p + pad_b), (p, p + pad_r), (0, 0)))
    else:
        h_tot = s * max(-(-(H + 2 * p) // s), h_eff)
        w_tot = s * max(-(-(W + 2 * p) // s), w_eff)
        x_p = jnp.pad(x, ((0, 0), (p, h_tot - H - p), (p, w_tot - W - p), (0, 0)))
        x_eff = (x_p.reshape(N, h_tot // s, s, w_tot // s, s, C1)
                 .transpose(0, 1, 3, 2, 4, 5)
                 .reshape(N, h_tot // s, w_tot // s, cin))
    x_eff = x_eff[:, :h_eff, :w_eff, :]

    # ---- overlapping row windows as a plain Blocked layout: ONE DMA per step,
    #      no in-kernel halo concat / second halo spec.  Halo rows (kp-1 per
    #      tile) are duplicated in this staging buffer; n_h == 1 (default for
    #      typical feature maps) makes it a pure no-copy view.
    if n_h == 1:
        x_tiled = x_eff
    else:
        x_tiled = jnp.stack(
            [x_eff[:, i * th:i * th + th + halo] for i in range(n_h)], axis=1
        ).reshape(N * n_h, th + halo, w_eff, cin)

    step_bytes = _step_vmem_bytes(th, Wo, w_eff, cin, c2t, kp)
    vmem_limit = int(min(0.9 * cap, max(32 * 1024 * 1024, 2 * step_bytes)))

    kernel = functools.partial(_conv_kernel, kp=kp, th=th, wo=Wo, per_tap=per_tap)

    # Grid = (C2 tiles, batch*row tiles).  The activation axis is innermost so a
    # weight/scale/bias tile keeps a constant block index across it (Mosaic
    # skips the redundant re-DMA) while activations stream.  Both axes are
    # independent -> "parallel" for megacore sharding.
    out = pl.pallas_call(
        kernel,
        out_shape=jax.ShapeDtypeStruct((N * n_h, th, Wo, C2p), jnp.bfloat16),
        grid_spec=pltpu.PrefetchScalarGridSpec(
            num_scalar_prefetch=0,
            grid=(n_c2, N * n_h),
            in_specs=[
                pl.BlockSpec((1, th + halo, w_eff, cin), lambda c, b: (b, 0, 0, 0)),
                pl.BlockSpec(w_block, lambda c, b: (0, 0, c)),
                pl.BlockSpec((1, c2t), lambda c, b: (0, c)),
                pl.BlockSpec((1, c2t), lambda c, b: (0, c)),
            ],
            out_specs=pl.BlockSpec((1, th, Wo, c2t), lambda c, b: (b, 0, 0, c)),
        ),
        compiler_params=pltpu.CompilerParams(
            dimension_semantics=("parallel", "parallel"),
            vmem_limit_bytes=vmem_limit,
        ),
    )(x_tiled, w_op, scale, bias)

    # Crop row / channel padding (cheap slice; stays NHWC bf16 for the next layer).
    return out.reshape(N, ho_pad, Wo, C2p)[:, :Ho, :, :C2]


def conv_bn_silu(x_nchw, weight_oihw, gamma, beta, running_mean, running_var,
                 *, k=1, s=1, p=None, eps=1e-3, block_h=None):
    """NCHW adapter (standalone-module parity only).  A full network should stay
    NHWC bf16 end-to-end and transpose once at the network boundary."""
    y = conv_bn_silu_nhwc(jnp.transpose(x_nchw, (0, 2, 3, 1)), weight_oihw,
                          gamma, beta, running_mean, running_var,
                          k=k, s=s, p=p, eps=eps, block_h=block_h)
    return jnp.transpose(y, (0, 3, 1, 2))


# --------------------------------------------------------------------------- #
# Pure-JAX reference (matches PyTorch eval-mode Conv.forward)
# --------------------------------------------------------------------------- #
def _reference(x_nchw, weight_oihw, gamma, beta, running_mean, running_var,
               *, k, s, p=None, eps=1e-3):
    p = autopad(k, p)
    y = lax.conv_general_dilated(
        x_nchw, weight_oihw, window_strides=(s, s),
        padding=((p, p), (p, p)),
        dimension_numbers=("NCHW", "OIHW", "NCHW"))
    scale = gamma / jnp.sqrt(running_var + eps)
    bias = beta - running_mean * scale
    y = y * scale[None, :, None, None] + bias[None, :, None, None]
    return y * jax.nn.sigmoid(y)


def _run_case(name, key, N, C1, H, W, C2, k, s, block_h=None):
    kx, kw_, kg, kb, km, kv = jax.random.split(key, 6)
    x = jax.random.normal(kx, (N, C1, H, W), jnp.float32)
    weight = jax.random.normal(kw_, (C2, C1, k, k), jnp.float32) * 0.1   # bias=False
    gamma = jax.random.uniform(kg, (C2,), jnp.float32, 0.5, 1.5)
    beta = jax.random.normal(kb, (C2,), jnp.float32) * 0.1
    rmean = jax.random.normal(km, (C2,), jnp.float32) * 0.1
    rvar = jax.random.uniform(kv, (C2,), jnp.float32, 0.5, 1.5)

    out = conv_bn_silu(x, weight, gamma, beta, rmean, rvar,
                       k=k, s=s, p=None, eps=1e-3, block_h=block_h)
    out = jax.block_until_ready(out)

    # Reference on bf16-rounded operands (kernel feeds the MXU in bf16,
    # accumulates in f32, stores bf16) -> rounding-level differences only.
    x_r = x.astype(jnp.bfloat16).astype(jnp.float32)
    w_r = weight.astype(jnp.bfloat16).astype(jnp.float32)
    ref = _reference(x_r, w_r, gamma, beta, rmean, rvar, k=k, s=s, eps=1e-3)

    p_ = autopad(k)
    Ho = (H + 2 * p_ - k) // s + 1
    Wo = (W + 2 * p_ - k) // s + 1
    assert out.shape == (N, C2, Ho, Wo), (name, out.shape)
    out_f32 = out.astype(jnp.float32)
    max_err = float(jnp.max(jnp.abs(out_f32 - ref)))
    assert jnp.allclose(out_f32, ref, rtol=2e-2, atol=2e-2), (name, max_err)


if __name__ == "__main__":
    key = jax.random.PRNGKey(0)
    k1, k2, k3, k4 = jax.random.split(key, 4)
    # Conv(4, 8, k=3, s=1): forced th=6 -> 3 row tiles (halo + padded last tile).
    _run_case("k3s1", k1, N=2, C1=4, H=16, W=16, C2=8, k=3, s=1, block_h=6)
    # Conv(4, 8, k=1, s=1): pointwise, single row tile, no halo.
    _run_case("k1s1", k2, N=2, C1=4, H=16, W=16, C2=8, k=1, s=1)
    # Conv(4, 8, k=3, s=2): downsample via wrapper space-to-depth.
    _run_case("k3s2", k3, N=2, C1=4, H=16, W=16, C2=8, k=3, s=2)
    # Conv(128, 16, k=3, s=1): Cin >= 128 -> per-tap accumulation path.
    _run_case("k3s1_deep", k4, N=1, C1=128, H=8, W=8, C2=16, k=3, s=1)
    print("KERNEL_OK")
</pallas_src>

<mosaic_0001>
module attributes {stable_mosaic.version = 11 : i64} {
  func.func @_conv_kernel(%arg0: i32, %arg1: i32, %arg2: memref<1x8x18x4xbf16, #tpu.memory_space<vmem>>, %arg3: memref<3x12x128xbf16, #tpu.memory_space<vmem>>, %arg4: memref<1x128xf32, #tpu.memory_space<vmem>>, %arg5: memref<1x128xf32, #tpu.memory_space<vmem>>, %arg6: memref<1x6x16x128xbf16, #tpu.memory_space<vmem>>) attributes {dimension_semantics = [#tpu.dimension_semantics<parallel>, #tpu.dimension_semantics<parallel>], iteration_bounds = array<i64: 1, 6>, scalar_prefetch = 0 : i64, scratch_operands = 0 : i64, tpu.core_type = #tpu.core_type<tc>, window_params = [{transform_indices = @transform_0, window_bounds = array<i64: 1, 8, 18, 4>}, {transform_indices = @transform_1, window_bounds = array<i64: 3, 12, 128>}, {transform_indices = @transform_2, window_bounds = array<i64: 1, 128>}, {transform_indices = @transform_3, window_bounds = array<i64: 1, 128>}, {transform_indices = @transform_4, window_bounds = array<i64: 1, 6, 16, 128>}]} {
    %c0 = arith.constant 0 : index
    %c0_0 = arith.constant 0 : index
    %c0_1 = arith.constant 0 : index
    %c0_2 = arith.constant 0 : index
    %0 = vector.load %arg2[%c0, %c0_0, %c0_1, %c0_2] : memref<1x8x18x4xbf16, #tpu.memory_space<vmem>>, vector<1x6x16x4xbf16>
    %1 = vector.shape_cast %0 : vector<1x6x16x4xbf16> to vector<6x16x4xbf16>
    %c0_3 = arith.constant 0 : index
    %c0_4 = arith.constant 0 : index
    %c1 = arith.constant 1 : index
    %c0_5 = arith.constant 0 : index
    %2 = vector.load %arg2[%c0_3, %c0_4, %c1, %c0_5] : memref<1x8x18x4xbf16, #tpu.memory_space<vmem>>, vector<1x6x16x4xbf16>
    %3 = vector.shape_cast %2 : vector<1x6x16x4xbf16> to vector<6x16x4xbf16>
    %c0_6 = arith.constant 0 : index
    %c0_7 = arith.constant 0 : index
    %c2 = arith.constant 2 : index
    %c0_8 = arith.constant 0 : index
    %4 = vector.load %arg2[%c0_6, %c0_7, %c2, %c0_8] : memref<1x8x18x4xbf16, #tpu.memory_space<vmem>>, vector<1x6x16x4xbf16>
    %5 = vector.shape_cast %4 : vector<1x6x16x4xbf16> to vector<6x16x4xbf16>
    %6 = tpu.concatenate %1, %3, %5 in 2 : vector<6x16x4xbf16>, vector<6x16x4xbf16>, vector<6x16x4xbf16> -> vector<6x16x12xbf16>
    %c0_9 = arith.constant 0 : index
    %c0_10 = arith.constant 0 : index
    %c0_11 = arith.constant 0 : index
    %7 = vector.load %arg3[%c0_9, %c0_10, %c0_11] : memref<3x12x128xbf16, #tpu.memory_space<vmem>>, vector<1x12x128xbf16>
    %8 = vector.shape_cast %7 : vector<1x12x128xbf16> to vector<12x128xbf16>
    %cst = arith.constant dense<0.000000e+00> : vector<6x16x128xf32>
    %9 = tpu.matmul %6, %8, %cst {dimension_numbers = #tpu.dot_dimension_numbers<[2], [0], [0, 1], [1], [0, 0, 0, 1, 1, 1], [], []>} : vector<6x16x12xbf16>, vector<12x128xbf16>, vector<6x16x128xf32> -> vector<6x16x128xf32>
    %c0_12 = arith.constant 0 : index
    %c1_13 = arith.constant 1 : index
    %c0_14 = arith.constant 0 : index
    %c0_15 = arith.constant 0 : index
    %10 = vector.load %arg2[%c0_12, %c1_13, %c0_14, %c0_15] : memref<1x8x18x4xbf16, #tpu.memory_space<vmem>>, vector<1x6x16x4xbf16>
    %11 = vector.shape_cast %10 : vector<1x6x16x4xbf16> to vector<6x16x4xbf16>
    %c0_16 = arith.constant 0 : index
    %c1_17 = arith.constant 1 : index
    %c1_18 = arith.constant 1 : index
    %c0_19 = arith.constant 0 : index
    %12 = vector.load %arg2[%c0_16, %c1_17, %c1_18, %c0_19] : memref<1x8x18x4xbf16, #tpu.memory_space<vmem>>, vector<1x6x16x4xbf16>
    %13 = vector.shape_cast %12 : vector<1x6x16x4xbf16> to vector<6x16x4xbf16>
    %c0_20 = arith.constant 0 : index
    %c1_21 = arith.constant 1 : index
    %c2_22 = arith.constant 2 : index
    %c0_23 = arith.constant 0 : index
    %14 = vector.load %arg2[%c0_20, %c1_21, %c2_22, %c0_23] : memref<1x8x18x4xbf16, #tpu.memory_space<vmem>>, vector<1x6x16x4xbf16>
    %15 = vector.shape_cast %14 : vector<1x6x16x4xbf16> to vector<6x16x4xbf16>
    %16 = tpu.concatenate %11, %13, %15 in 2 : vector<6x16x4xbf16>, vector<6x16x4xbf16>, vector<6x16x4xbf16> -> vector<6x16x12xbf16>
    %c1_24 = arith.constant 1 : index
    %c0_25 = arith.constant 0 : index
    %c0_26 = arith.constant 0 : index
    %17 = vector.load %arg3[%c1_24, %c0_25, %c0_26] : memref<3x12x128xbf16, #tpu.memory_space<vmem>>, vector<1x12x128xbf16>
    %18 = vector.shape_cast %17 : vector<1x12x128xbf16> to vector<12x128xbf16>
    %cst_27 = arith.constant dense<0.000000e+00> : vector<6x16x128xf32>
    %19 = tpu.matmul %16, %18, %cst_27 {dimension_numbers = #tpu.dot_dimension_numbers<[2], [0], [0, 1], [1], [0, 0, 0, 1, 1, 1], [], []>} : vector<6x16x12xbf16>, vector<12x128xbf16>, vector<6x16x128xf32> -> vector<6x16x128xf32>
    %20 = arith.addf %9, %19 : vector<6x16x128xf32>
    %c0_28 = arith.constant 0 : index
    %c2_29 = arith.constant 2 : index
    %c0_30 = arith.constant 0 : index
    %c0_31 = arith.constant 0 : index
    %21 = vector.load %arg2[%c0_28, %c2_29, %c0_30, %c0_31] : memref<1x8x18x4xbf16, #tpu.memory_space<vmem>>, vector<1x6x16x4xbf16>
    %22 = vector.shape_cast %21 : vector<1x6x16x4xbf16> to vector<6x16x4xbf16>
    %c0_32 = arith.constant 0 : index
    %c2_33 = arith.constant 2 : index
    %c1_34 = arith.constant 1 : index
    %c0_35 = arith.constant 0 : index
    %23 = vector.load %arg2[%c0_32, %c2_33, %c1_34, %c0_35] : memref<1x8x18x4xbf16, #tpu.memory_space<vmem>>, vector<1x6x16x4xbf16>
    %24 = vector.shape_cast %23 : vector<1x6x16x4xbf16> to vector<6x16x4xbf16>
    %c0_36 = arith.constant 0 : index
    %c2_37 = arith.constant 2 : index
    %c2_38 = arith.constant 2 : index
    %c0_39 = arith.constant 0 : index
    %25 = vector.load %arg2[%c0_36, %c2_37, %c2_38, %c0_39] : memref<1x8x18x4xbf16, #tpu.memory_space<vmem>>, vector<1x6x16x4xbf16>
    %26 = vector.shape_cast %25 : vector<1x6x16x4xbf16> to vector<6x16x4xbf16>
    %27 = tpu.concatenate %22, %24, %26 in 2 : vector<6x16x4xbf16>, vector<6x16x4xbf16>, vector<6x16x4xbf16> -> vector<6x16x12xbf16>
    %c2_40 = arith.constant 2 : index
    %c0_41 = arith.constant 0 : index
    %c0_42 = arith.constant 0 : index
    %28 = vector.load %arg3[%c2_40, %c0_41, %c0_42] : memref<3x12x128xbf16, #tpu.memory_space<vmem>>, vector<1x12x128xbf16>
    %29 = vector.shape_cast %28 : vector<1x12x128xbf16> to vector<12x128xbf16>
    %cst_43 = arith.constant dense<0.000000e+00> : vector<6x16x128xf32>
    %30 = tpu.matmul %27, %29, %cst_43 {dimension_numbers = #tpu.dot_dimension_numbers<[2], [0], [0, 1], [1], [0, 0, 0, 1, 1, 1], [], []>} : vector<6x16x12xbf16>, vector<12x128xbf16>, vector<6x16x128xf32> -> vector<6x16x128xf32>
    %31 = arith.addf %20, %30 : vector<6x16x128xf32>
    %c0_44 = arith.constant 0 : index
    %c0_45 = arith.constant 0 : index
    %32 = vector.load %arg4[%c0_44, %c0_45] : memref<1x128xf32, #tpu.memory_space<vmem>>, vector<1x128xf32>
    %33 = vector.shape_cast %32 : vector<1x128xf32> to vector<128xf32>
    %34 = vector.shape_cast %33 : vector<128xf32> to vector<1x1x128xf32>
    %35 = vector.broadcast %34 : vector<1x1x128xf32> to vector<6x16x128xf32>
    %36 = arith.mulf %31, %35 : vector<6x16x128xf32>
    %c0_46 = arith.constant 0 : index
    %c0_47 = arith.constant 0 : index
    %37 = vector.load %arg5[%c0_46, %c0_47] : memref<1x128xf32, #tpu.memory_space<vmem>>, vector<1x128xf32>
    %38 = vector.shape_cast %37 : vector<1x128xf32> to vector<128xf32>
    %39 = vector.shape_cast %38 : vector<128xf32> to vector<1x1x128xf32>
    %40 = vector.broadcast %39 : vector<1x1x128xf32> to vector<6x16x128xf32>
    %41 = arith.addf %36, %40 : vector<6x16x128xf32>
    %42 = arith.negf %41 : vector<6x16x128xf32>
    %43 = math.exp %42 : vector<6x16x128xf32>
    %cst_48 = arith.constant 1.000000e+00 : f32
    %44 = vector.broadcast %cst_48 : f32 to vector<6x16x128xf32>
    %45 = arith.addf %44, %43 : vector<6x16x128xf32>
    %46 = arith.divf %44, %45 : vector<6x16x128xf32>
    %47 = arith.mulf %41, %46 : vector<6x16x128xf32>
    %48 = arith.truncf %47 : vector<6x16x128xf32> to vector<6x16x128xbf16>
    %c0_49 = arith.constant 0 : index
    %c0_50 = arith.constant 0 : index
    %c0_51 = arith.constant 0 : index
    %c0_52 = arith.constant 0 : index
    %49 = vector.load %arg6[%c0_49, %c0_50, %c0_51, %c0_52] : memref<1x6x16x128xbf16, #tpu.memory_space<vmem>>, vector<1x6x16x128xbf16>
    %50 = vector.shape_cast %49 : vector<1x6x16x128xbf16> to vector<6x16x128xbf16>
    %51 = vector.shape_cast %48 : vector<6x16x128xbf16> to vector<1x6x16x128xbf16>
    tpu.vector_store %arg6[%c0_49, %c0_50, %c0_51, %c0_52], %51 {strides = array<i32>} : memref<1x6x16x128xbf16, #tpu.memory_space<vmem>>, vector<1x6x16x128xbf16>,
    return
  }
  func.func @transform_0(%arg0: i32, %arg1: i32) -> (i32, i32, i32, i32) {
    %c0_i32 = arith.constant 0 : i32
    %c0_i32_0 = arith.constant 0 : i32
    %c0_i32_1 = arith.constant 0 : i32
    %c0_i32_2 = arith.constant 0 : i32
    return %arg1, %c0_i32, %c0_i32_0, %c0_i32_1 : i32, i32, i32, i32
  }
  func.func @transform_1(%arg0: i32, %arg1: i32) -> (i32, i32, i32) {
    %c0_i32 = arith.constant 0 : i32
    %c0_i32_0 = arith.constant 0 : i32
    %c0_i32_1 = arith.constant 0 : i32
    return %c0_i32, %c0_i32_0, %arg0 : i32, i32, i32
  }
  func.func @transform_2(%arg0: i32, %arg1: i32) -> (i32, i32) {
    %c0_i32 = arith.constant 0 : i32
    %c0_i32_0 = arith.constant 0 : i32
    return %c0_i32, %arg0 : i32, i32
  }
  func.func @transform_3(%arg0: i32, %arg1: i32) -> (i32, i32) {
    %c0_i32 = arith.constant 0 : i32
    %c0_i32_0 = arith.constant 0 : i32
    return %c0_i32, %arg0 : i32, i32
  }
  func.func @transform_4(%arg0: i32, %arg1: i32) -> (i32, i32, i32, i32) {
    %c0_i32 = arith.constant 0 : i32
    %c0_i32_0 = arith.constant 0 : i32
    %c0_i32_1 = arith.constant 0 : i32
    return %arg1, %c0_i32, %c0_i32_0, %arg0 : i32, i32, i32, i32
  }
}

</mosaic_0001>

<llo_original>
// kernel: tpu_custom_call.1
$region0: #{tpu_custom_call.1}
  #allocation0 [shape = 'u32[]', space=smem, size = 0x4, offset = 0x4, fixed_abs, tag = 'smem constant byte address 0x4 - core index']
  #allocation1 [shape = 'u32[144,128]{1,0:T(1,128)}', space=vmem, size = 0x12000, scoped, tag = 'internal scratch']
  %s0 = inlined_call_operand.vmem [shape: bf16[6,8,18,4], index: 0, kind: input, shape index: {}]
  %s1 = inlined_call_operand.vmem [shape: bf16[3,12,128], index: 1, kind: input, shape index: {}]
  %s2 = inlined_call_operand.vmem [shape: f32[1,128], index: 2, kind: input, shape index: {}]
  %s3 = inlined_call_operand.vmem [shape: f32[1,128], index: 3, kind: input, shape index: {}]
  %s4 = inlined_call_operand.hbm [shape: bf16[6,6,16,128], index: 4, kind: output, shape index: {}]
  %s5 = sld [smem:[#allocation0]]
  $region49: #{tpu_custom_call.1} parent=0
    _
  %s7 = ssub.s32 1, %s5
  %s8 = scalar_select 0, %s7, %s5
  $region1: #{tpu_custom_call.1} parent=0
    #allocation2 [shape = 'u8[49152]{0}', space=vmem, size = 0xc000, scoped, tag = 'output window, operand 0']
    #allocation3 [shape = 's32[2]{0}', space=sflag, size = 0x8, scoped, tag = 'scoped memory for tpu_custom_call.1']
    %9 = vsyncpa [#allocation3], 0
    %s10 = scalar_lea.sflag [#allocation3], 1
    %11 = vsyncpa %s10, 0
    loop: start=0, step=1, limit=8
    $region2: #{tpu_custom_call.1} parent=1 // loop_pre_header
      _
    $region3: #{tpu_custom_call.1} parent=1 // loop_header
      %s13 = sphi 0, %s17
      %p14 = scmp.ge.s32.totalorder %s13, 8
      %s20 = sphi 0, %s32
      %s21 = sphi 0, %s28
      %s22 = sphi 0, %s20
      %s23 = sphi 0, %s21
      %s24 = sphi 0, %s22
      %s25 = sphi 0, %s23
      %s35 = sphi 0, %s37
      %s38 = sphi 0, %s35
      %s39 = sphi 0, %s38
      %s55 = sphi 0, %s39
      %s61 = sphi 0, %s63
      %s64 = sphi 0, %s61
      %s65 = sphi 0, %s64
      %s81 = sphi 0, %s65
      %s87 = sphi 0, %s89
      %s90 = sphi 0, %s87
      %s91 = sphi 0, %s90
      %s107 = sphi 0, %s91
      %s113 = sphi 0, %s115
      %s116 = sphi 0, %s113
      %s117 = sphi 0, %s116
      %s133 = sphi 0, %s117
      %s141 = sphi 0, %s143
      %s144 = sphi 0, %s141
      %s145 = sphi 0, %s144
      %s161 = sphi 0, %s145
    $region4: #{tpu_custom_call.1} parent=1 // loop_header_branch
      %16 = sbr.rel (%p14) target = $region8
    $region5: #{tpu_custom_call.1} parent=1 // loop_body
      %s18 = ssub.s32 %s13, 1
      %s19 = ssub.s32 %s13, 2
      %s26 = sadd.s32 1, %s21
      %p27 = scmp.ge.s32.totalorder %s26, 6
      %s28 = scalar_select %p27, 0, %s26
      %s29 = sadd.s32 1, %s20
      %s30 = scalar_select %p27, %s29, %s20
      %p31 = scmp.ge.s32.totalorder %s30, 1
      %s32 = scalar_select %p31, 0, %s30
      %s33 = ssub.s32 %s21, %s28
      %p34 = scmp.eq.s32.totalorder %s33, 0
      %s36 = sadd.s32 %s35, 1
      %s37 = scalar_select %p34, %s35, %s36
      %p40 = pneg %p34
      %p41 = scmp.eq.s32.totalorder %s13, 5
      %p42 = por %p40, %p41
      %p43 = scmp.ne.s32.totalorder %s35, %s38
      %p44 = scmp.eq.s32.totalorder %s13, 0
      %p45 = por %p43, %p44
      %p46 = scmp.ne.s32.totalorder %s35, %s38
      %p47 = scmp.eq.s32.totalorder %s18, 5
      %p48 = por %p46, %p47
      %p49 = scmp.ne.s32.totalorder %s38, %s39
      %p50 = scmp.eq.s32.totalorder %s18, 0
      %p51 = por %p49, %p50
      %p52 = scmp.ne.s32.totalorder %s38, %s39
      %p53 = scmp.eq.s32.totalorder %s19, 5
      %p54 = por %p52, %p53
      %p56 = scmp.ne.s32.totalorder %s39, %s55
      %p57 = scmp.eq.s32.totalorder %s19, 0
      %p58 = por %p56, %p57
      %s59 = ssub.s32 %s20, %s32
      %p60 = scmp.eq.s32.totalorder %s59, 0
      %s62 = sadd.s32 %s61, 1
      %s63 = scalar_select %p60, %s61, %s62
      %p66 = pneg %p60
      %p67 = scmp.eq.s32.totalorder %s13, 5
      %p68 = por %p66, %p67
      %p69 = scmp.ne.s32.totalorder %s61, %s64
      %p70 = scmp.eq.s32.totalorder %s13, 0
      %p71 = por %p69, %p70
      %p72 = scmp.ne.s32.totalorder %s61, %s64
      %p73 = scmp.eq.s32.totalorder %s18, 5
      %p74 = por %p72, %p73
      %p75 = scmp.ne.s32.totalorder %s64, %s65
      %p76 = scmp.eq.s32.totalorder %s18, 0
      %p77 = por %p75, %p76
      %p78 = scmp.ne.s32.totalorder %s64, %s65
      %p79 = scmp.eq.s32.totalorder %s19, 5
      %p80 = por %p78, %p79
      %p82 = scmp.ne.s32.totalorder %s65, %s81
      %p83 = scmp.eq.s32.totalorder %s19, 0
      %p84 = por %p82, %p83
      %s85 = ssub.s32 %s20, %s32
      %p86 = scmp.eq.s32.totalorder %s85, 0
      %s88 = sadd.s32 %s87, 1
      %s89 = scalar_select %p86, %s87, %s88
      %p92 = pneg %p86
      %p93 = scmp.eq.s32.totalorder %s13, 5
      %p94 = por %p92, %p93
      %p95 = scmp.ne.s32.totalorder %s87, %s90
      %p96 = scmp.eq.s32.totalorder %s13, 0
      %p97 = por %p95, %p96
      %p98 = scmp.ne.s32.totalorder %s87, %s90
      %p99 = scmp.eq.s32.totalorder %s18, 5
      %p100 = por %p98, %p99
      %p101 = scmp.ne.s32.totalorder %s90, %s91
      %p102 = scmp.eq.s32.totalorder %s18, 0
      %p103 = por %p101, %p102
      %p104 = scmp.ne.s32.totalorder %s90, %s91
      %p105 = scmp.eq.s32.totalorder %s19, 5
      %p106 = por %p104, %p105
      %p108 = scmp.ne.s32.totalorder %s91, %s107
      %p109 = scmp.eq.s32.totalorder %s19, 0
      %p110 = por %p108, %p109
      %s111 = ssub.s32 %s20, %s32
      %p112 = scmp.eq.s32.totalorder %s111, 0
      %s114 = sadd.s32 %s113, 1
      %s115 = scalar_select %p112, %s113, %s114
      %p118 = pneg %p112
      %p119 = scmp.eq.s32.totalorder %s13, 5
      %p120 = por %p118, %p119
      %p121 = scmp.ne.s32.totalorder %s113, %s116
      %p122 = scmp.eq.s32.totalorder %s13, 0
      %p123 = por %p121, %p122
      %p124 = scmp.ne.s32.totalorder %s113, %s116
      %p125 = scmp.eq.s32.totalorder %s18, 5
      %p126 = por %p124, %p125
      %p127 = scmp.ne.s32.totalorder %s116, %s117
      %p128 = scmp.eq.s32.totalorder %s18, 0
      %p129 = por %p127, %p128
      %p130 = scmp.ne.s32.totalorder %s116, %s117
      %p131 = scmp.eq.s32.totalorder %s19, 5
      %p132 = por %p130, %p131
      %p134 = scmp.ne.s32.totalorder %s117, %s133
      %p135 = scmp.eq.s32.totalorder %s19, 0
      %p136 = por %p134, %p135
      %s137 = ssub.s32 %s21, %s28
      %s138 = ssub.s32 %s20, %s32
      %s139 = sor.u32 %s137, %s138
      %p140 = scmp.eq.s32.totalorder %s139, 0
      %s142 = sadd.s32 %s141, 1
      %s143 = scalar_select %p140, %s141, %s142
      %p146 = pneg %p140
      %p147 = scmp.eq.s32.totalorder %s13, 5
      %p148 = por %p146, %p147
      %p149 = scmp.ne.s32.totalorder %s141, %s144
      %p150 = scmp.eq.s32.totalorder %s13, 0
      %p151 = por %p149, %p150
      %p152 = scmp.ne.s32.totalorder %s141, %s144
      %p153 = scmp.eq.s32.totalorder %s18, 5
      %p154 = por %p152, %p153
      %p155 = scmp.ne.s32.totalorder %s144, %s145
      %p156 = scmp.eq.s32.totalorder %s18, 0
      %p157 = por %p155, %p156
      %p158 = scmp.ne.s32.totalorder %s144, %s145
      %p159 = scmp.eq.s32.totalorder %s19, 5
      %p160 = por %p158, %p159
      %p162 = scmp.ne.s32.totalorder %s145, %s161
      %p163 = scmp.eq.s32.totalorder %s19, 0
      %p164 = por %p162, %p163
      %p165 = scmp.le.s32.totalorder 1, %s13
      %p166 = scmp.lt.s32.totalorder %s13, 7
      %p167 = pnand %p165, %p166
      %p168 = pneg %p167
      // Predicated region
      $region9: #{tpu_custom_call.1} parent=5 // pred_check
        _
      $region10: #{tpu_custom_call.1} parent=5 // pred_check_branch
        %170 = sbr.rel (%p167) target = $region12
      $region11: #{tpu_custom_call.1} parent=5 // pred_region
        %s171 = ssub.s32 %s13, 1
        // Predicated region
        $region13: #{tpu_custom_call.1} parent=11 // pred_check
          %p172 = pneg %p77
        $region14: #{tpu_custom_call.1} parent=11 // pred_check_branch
          %174 = sbr.rel (%p172) target = $region16
        $region15: #{tpu_custom_call.1} parent=11 // pred_region
          %p175 = scmp.lt.s32.totalorder %s22, 0
          %s176 = scalar_select %p175, %s22, 0
          %s177 = smul.addr %s176, 4
          %s178 = scalar_lea.vmem %s1, %s177
        $region16: #{tpu_custom_call.1} parent=11 // pred_fallthru
          _
        // Predicated region
        $region17: #{tpu_custom_call.1} parent=11 // pred_check
          %p179 = pneg %p103
        $region18: #{tpu_custom_call.1} parent=11 // pred_check_branch
          %181 = sbr.rel (%p179) target = $region20
        $region19: #{tpu_custom_call.1} parent=11 // pred_region
          %p182 = scmp.lt.s32.totalorder %s22, 0
          %s183 = scalar_select %p182, %s22, 0
          %s184 = scalar_lea.vmem %s2, %s183
        $region20: #{tpu_custom_call.1} parent=11 // pred_fallthru
          _
        // Predicated region
        $region21: #{tpu_custom_call.1} parent=11 // pred_check
          %p185 = pneg %p129
        $region22: #{tpu_custom_call.1} parent=11 // pred_check_branch
          %187 = sbr.rel (%p185) target = $region24
        $region23: #{tpu_custom_call.1} parent=11 // pred_region
          %p188 = scmp.lt.s32.totalorder %s22, 0
          %s189 = scalar_select %p188, %s22, 0
          %s190 = scalar_lea.vmem %s3, %s189
        $region24: #{tpu_custom_call.1} parent=11 // pred_fallthru
          _
      $region12: #{tpu_custom_call.1} parent=5 // pred_fallthru
        _
      %p191 = scmp.lt.s32.totalorder %s13, 6
      // Predicated region
      $region25: #{tpu_custom_call.1} parent=5 // pred_check
        %p192 = pneg %p191
      $region26: #{tpu_custom_call.1} parent=5 // pred_check_branch
        %194 = sbr.rel (%p192) target = $region28
      $region27: #{tpu_custom_call.1} parent=5 // pred_region
        // Predicated region
        $region29: #{tpu_custom_call.1} parent=27 // pred_check
          %p195 = pneg %p45
        $region30: #{tpu_custom_call.1} parent=27 // pred_check_branch
          %197 = sbr.rel (%p195) target = $region32
        $region31: #{tpu_custom_call.1} parent=27 // pred_region
          %p198 = scmp.lt.s32.totalorder %s21, 5
          %s199 = scalar_select %p198, %s21, 5
          %s200 = smul.addr %s199, 24
          %s201 = smul.addr %s200, 4
          %s202 = scalar_lea.vmem %s0, %s201
        $region32: #{tpu_custom_call.1} parent=27 // pred_fallthru
          _
      $region28: #{tpu_custom_call.1} parent=5 // pred_fallthru
        _
      %p203 = scmp.le.s32.totalorder 1, %s13
      %p204 = scmp.lt.s32.totalorder %s13, 7
      %p205 = pnand %p203, %p204
      %p206 = pneg %p205
      // Predicated region
      $region33: #{tpu_custom_call.1} parent=5 // pred_check
        _
      $region34: #{tpu_custom_call.1} parent=5 // pred_check_branch
        %208 = sbr.rel (%p205) target = $region36
      $region35: #{tpu_custom_call.1} parent=5 // pred_region
        %s209 = ssub.s32 %s13, 1
        %p210 = scmp.lt.s32.totalorder %s23, 5
        %s211 = scalar_select %p210, %s23, 5
        %s212 = smul.addr %s211, 24
        %s213 = smul.addr %s212, 4
        %s214 = scalar_lea.vmem %s0, %s213
        %p215 = pneg %p51
        %p216 = pneg %p48
        %p217 = scmp.lt.s32.totalorder %s22, 0
        %s218 = scalar_select %p217, %s22, 0
        %s219 = smul.addr %s218, 4
        %s220 = scalar_lea.vmem %s1, %s219
        %p221 = pneg %p77
        %p222 = pneg %p74
        %p223 = scmp.lt.s32.totalorder %s22, 0
        %s224 = scalar_select %p223, %s22, 0
        %s225 = scalar_lea.vmem %s2, %s224
        %p226 = pneg %p103
        %p227 = pneg %p100
        %p228 = scmp.lt.s32.totalorder %s22, 0
        %s229 = scalar_select %p228, %s22, 0
        %s230 = scalar_lea.vmem %s3, %s229
        %p231 = pneg %p129
        %p232 = pneg %p126
        %p233 = pneg %p157
        %p234 = pneg %p154
        %s235 = sand.u32 %s144, 1
        %s236 = scalar_lea.sflag [#allocation3], %s235
        %s237 = sand.u32 %s144, 1
        %s238 = smul.addr %s237, 48
        %s239 = scalar_lea.vmem [#allocation2], %s238
        %p240 = scmp.lt.s32.totalorder %s23, 5
        %s241 = scalar_select %p240, %s23, 5
        %s242 = smul.addr %s241, 24
        %s243 = smul.addr %s242, 4
        %s244 = scalar_lea.vmem %s0, %s243
        %p245 = scmp.lt.s32.totalorder %s22, 0
        %s246 = scalar_select %p245, %s22, 0
        %s247 = smul.addr %s246, 4
        %s248 = scalar_lea.vmem %s1, %s247
        %p249 = scmp.lt.s32.totalorder %s22, 0
        %s250 = scalar_select %p249, %s22, 0
        %s251 = scalar_lea.vmem %s2, %s250
        %p252 = scmp.lt.s32.totalorder %s22, 0
        %s253 = scalar_select %p252, %s22, 0
        %s254 = scalar_lea.vmem %s3, %s253
        %v256 = vld [vmem:[%s244] sm:$0xf]
        %v257 = vld [vmem:[%s244 + $0x4] sm:$0xf]
        %v258 = vld [vmem:[%s244 + $0xc] sm:$0xf]
        %v259 = vld [vmem:[%s244 + $0x10] sm:$0xf]
        %v260 = vld [vmem:[%s244 + $0x18] sm:$0xf]
        %v261 = vld [vmem:[%s244 + $0x1c] sm:$0xf]
        %v262 = vld [vmem:[%s244 + $0x24] sm:$0xf]
        %v263 = vld [vmem:[%s244 + $0x28] sm:$0xf]
        %v264 = vld [vmem:[%s244 + $0x30] sm:$0xf]
        %v265 = vld [vmem:[%s244 + $0x34] sm:$0xf]
        %v266 = vld [vmem:[%s244 + $0x3c] sm:$0xf]
        %v267 = vld [vmem:[%s244 + $0x40] sm:$0xf]
        %v268 = vld [vmem:[%s244 + $0x8] sm:$0x1]
        %v269 = vld [vmem:[%s244 + $0x14] sm:$0x1]
        %v270 = vld [vmem:[%s244 + $0x20] sm:$0x1]
        %v271 = vld [vmem:[%s244 + $0x2c] sm:$0x1]
        %v272 = vld [vmem:[%s244 + $0x38] sm:$0x1]
        %v273 = vld [vmem:[%s244 + $0x44] sm:$0x1]
        %v274 = vld [vmem:[%s244] sm:$0xe]
        %v275 = vld [vmem:[%s244 + $0xc] sm:$0xe]
        %v276 = vld [vmem:[%s244 + $0x18] sm:$0xe]
        %v277 = vld [vmem:[%s244 + $0x24] sm:$0xe]
        %v278 = vld [vmem:[%s244 + $0x30] sm:$0xe]
        %v279 = vld [vmem:[%s244 + $0x3c] sm:$0xe]
        %v292 = vunpack.c.l.b16 %v256
        %v293 = vunpack.c.l.b16 %v257
        %v294 = vunpack.c.l.b16 %v258
        %v295 = vunpack.c.l.b16 %v259
        %v296 = vunpack.c.l.b16 %v260
        %v297 = vunpack.c.l.b16 %v261
        %v298 = vunpack.c.l.b16 %v262
        %v299 = vunpack.c.l.b16 %v263
        %v300 = vunpack.c.l.b16 %v264
        %v301 = vunpack.c.l.b16 %v265
        %v302 = vunpack.c.l.b16 %v266
        %v303 = vunpack.c.l.b16 %v267
        %v304 = vpack.c.b16 %v293, %v292
        %v305 = vpack.c.b16 %v295, %v294
        %v306 = vpack.c.b16 %v297, %v296
        %v307 = vpack.c.b16 %v299, %v298
        %v308 = vpack.c.b16 %v301, %v300
        %v309 = vpack.c.b16 %v303, %v302
        %v316 = vunpack.c.l.b16 %v268
        %v317 = vunpack.c.l.b16 %v269
        %v318 = vunpack.c.l.b16 %v270
        %v319 = vunpack.c.l.b16 %v271
        %v320 = vunpack.c.l.b16 %v272
        %v321 = vunpack.c.l.b16 %v273
        %v322 = vpack.c.b16 %v316, %v316
        %v323 = vpack.c.b16 %v317, %v317
        %v324 = vpack.c.b16 %v318, %v318
        %v325 = vpack.c.b16 %v319, %v319
        %v326 = vpack.c.b16 %v320, %v320
        %v327 = vpack.c.b16 %v321, %v321
        %vm328 = vsmask.f32 7424
        %v330 = vshrl.u32 %v304, 16
        %v332 = vshll.u32 %v304, 16
        %v334 = vrot.slane %v332, 1
        %v335 = vor.u32 %v330, %v334
        %v337 = vshll.u32 %v322, 16
        %v339 = vrot.slane %v337, 1
        %v340 = vsel %vm328, %v335, %v339
        %v342 = vshrl.u32 %v305, 16
        %v344 = vshll.u32 %v305, 16
        %v346 = vrot.slane %v344, 1
        %v347 = vor.u32 %v342, %v346
        %v349 = vshll.u32 %v323, 16
        %v351 = vrot.slane %v349, 1
        %v352 = vsel %vm328, %v347, %v351
        %v354 = vshrl.u32 %v306, 16
        %v356 = vshll.u32 %v306, 16
        %v358 = vrot.slane %v356, 1
        %v359 = vor.u32 %v354, %v358
        %v361 = vshll.u32 %v324, 16
        %v363 = vrot.slane %v361, 1
        %v364 = vsel %vm328, %v359, %v363
        %v366 = vshrl.u32 %v307, 16
        %v368 = vshll.u32 %v307, 16
        %v370 = vrot.slane %v368, 1
        %v371 = vor.u32 %v366, %v370
        %v373 = vshll.u32 %v325, 16
        %v375 = vrot.slane %v373, 1
        %v376 = vsel %vm328, %v371, %v375
        %v378 = vshrl.u32 %v308, 16
        %v380 = vshll.u32 %v308, 16
        %v382 = vrot.slane %v380, 1
        %v383 = vor.u32 %v378, %v382
        %v385 = vshll.u32 %v326, 16
        %v387 = vrot.slane %v385, 1
        %v388 = vsel %vm328, %v383, %v387
        %v390 = vshrl.u32 %v309, 16
        %v392 = vshll.u32 %v309, 16
        %v394 = vrot.slane %v392, 1
        %v395 = vor.u32 %v390, %v394
        %v397 = vshll.u32 %v327, 16
        %v399 = vrot.slane %v397, 1
        %v400 = vsel %vm328, %v395, %v399
        %401 = vrot.lane.b32.xlu0 %v340, 4
        %v402 = vpop.permute.xlu0 %401
        %403 = vrot.lane.b32.xlu0 %v352, 4
        %v404 = vpop.permute.xlu0 %403
        %405 = vrot.lane.b32.xlu0 %v364, 4
        %v406 = vpop.permute.xlu0 %405
        %407 = vrot.lane.b32.xlu0 %v376, 4
        %v408 = vpop.permute.xlu0 %407
        %409 = vrot.lane.b32.xlu0 %v388, 4
        %v410 = vpop.permute.xlu0 %409
        %411 = vrot.lane.b32.xlu0 %v400, 4
        %v412 = vpop.permute.xlu0 %411
        %v419 = vunpack.c.l.b16 %v274
        %v420 = vunpack.c.l.b16 %v275
        %v421 = vunpack.c.l.b16 %v276
        %v422 = vunpack.c.l.b16 %v277
        %v423 = vunpack.c.l.b16 %v278
        %v424 = vunpack.c.l.b16 %v279
        %v425 = vpack.c.b16 %v293, %v419
        %v426 = vpack.c.b16 %v295, %v420
        %v427 = vpack.c.b16 %v297, %v421
        %v428 = vpack.c.b16 %v299, %v422
        %v429 = vpack.c.b16 %v301, %v423
        %v430 = vpack.c.b16 %v303, %v424
        %vm431 = vcmask 1046528
        %v432 = vrot.slane %v425, 1
        %v433 = vrot.slane %v322, 1
        %v434 = vsel %vm431, %v432, %v433
        %v435 = vrot.slane %v426, 1
        %v436 = vrot.slane %v323, 1
        %v437 = vsel %vm431, %v435, %v436
        %v438 = vrot.slane %v427, 1
        %v439 = vrot.slane %v324, 1
        %v440 = vsel %vm431, %v438, %v439
        %v441 = vrot.slane %v428, 1
        %v442 = vrot.slane %v325, 1
        %v443 = vsel %vm431, %v441, %v442
        %v444 = vrot.slane %v429, 1
        %v445 = vrot.slane %v326, 1
        %v446 = vsel %vm431, %v444, %v445
        %v447 = vrot.slane %v430, 1
        %v448 = vrot.slane %v327, 1
        %v449 = vsel %vm431, %v447, %v448
        %450 = vrot.lane.b32.xlu0 %v434, 8
        %v451 = vpop.permute.xlu0 %450
        %452 = vrot.lane.b32.xlu0 %v437, 8
        %v453 = vpop.permute.xlu0 %452
        %454 = vrot.lane.b32.xlu0 %v440, 8
        %v455 = vpop.permute.xlu0 %454
        %456 = vrot.lane.b32.xlu0 %v443, 8
        %v457 = vpop.permute.xlu0 %456
        %458 = vrot.lane.b32.xlu0 %v446, 8
        %v459 = vpop.permute.xlu0 %458
        %460 = vrot.lane.b32.xlu0 %v449, 8
        %v461 = vpop.permute.xlu0 %460
        %vm462 = vcmask 31744
        %v464 = vsel %vm462, %v304, %v402
        %v466 = vsel %vm462, %v305, %v404
        %v468 = vsel %vm462, %v306, %v406
        %v470 = vsel %vm462, %v307, %v408
        %v472 = vsel %vm462, %v308, %v410
        %v474 = vsel %vm462, %v309, %v412
        %vm475 = vcmask 64512
        %v477 = vsel %vm475, %v464, %v451
        %v479 = vsel %vm475, %v466, %v453
        %v481 = vsel %vm475, %v468, %v455
        %v483 = vsel %vm475, %v470, %v457
        %v485 = vsel %vm475, %v472, %v459
        %v487 = vsel %vm475, %v474, %v461
        %v488 = vld [vmem:[%s248] sm:$0xf]
        %v489 = vld [vmem:[%s248 + $0x4] sm:$0x3]
        %s490 = scalar_lea.vmem %s244, 12
        %v491 = vld [vmem:[%s490] sm:$0xf]
        %v492 = vld [vmem:[%s490 + $0x4] sm:$0xf]
        %v493 = vld [vmem:[%s490 + $0xc] sm:$0xf]
        %v494 = vld [vmem:[%s490 + $0x10] sm:$0xf]
        %v495 = vld [vmem:[%s490 + $0x18] sm:$0xf]
        %v496 = vld [vmem:[%s490 + $0x1c] sm:$0xf]
        %v497 = vld [vmem:[%s490 + $0x24] sm:$0xf]
        %v498 = vld [vmem:[%s490 + $0x28] sm:$0xf]
        %v499 = vld [vmem:[%s490 + $0x30] sm:$0xf]
        %v500 = vld [vmem:[%s490 + $0x34] sm:$0xf]
        %v501 = vld [vmem:[%s490 + $0x3c] sm:$0xf]
        %v502 = vld [vmem:[%s490 + $0x40] sm:$0xf]
        %v503 = vld [vmem:[%s490 + $0x8] sm:$0x1]
        %v504 = vld [vmem:[%s490 + $0x14] sm:$0x1]
        %v505 = vld [vmem:[%s490 + $0x20] sm:$0x1]
        %v506 = vld [vmem:[%s490 + $0x2c] sm:$0x1]
        %v507 = vld [vmem:[%s490 + $0x38] sm:$0x1]
        %v508 = vld [vmem:[%s490 + $0x44] sm:$0x1]
        %v509 = vld [vmem:[%s490] sm:$0xe]
        %v510 = vld [vmem:[%s490 + $0xc] sm:$0xe]
        %v511 = vld [vmem:[%s490 + $0x18] sm:$0xe]
        %v512 = vld [vmem:[%s490 + $0x24] sm:$0xe]
        %v513 = vld [vmem:[%s490 + $0x30] sm:$0xe]
        %v514 = vld [vmem:[%s490 + $0x3c] sm:$0xe]
        %v527 = vunpack.c.l.b16 %v491
        %v528 = vunpack.c.l.b16 %v492
        %v529 = vunpack.c.l.b16 %v493
        %v530 = vunpack.c.l.b16 %v494
        %v531 = vunpack.c.l.b16 %v495
        %v532 = vunpack.c.l.b16 %v496
        %v533 = vunpack.c.l.b16 %v497
        %v534 = vunpack.c.l.b16 %v498
        %v535 = vunpack.c.l.b16 %v499
        %v536 = vunpack.c.l.b16 %v500
        %v537 = vunpack.c.l.b16 %v501
        %v538 = vunpack.c.l.b16 %v502
        %v539 = vpack.c.b16 %v528, %v527
        %v540 = vpack.c.b16 %v530, %v529
        %v541 = vpack.c.b16 %v532, %v531
        %v542 = vpack.c.b16 %v534, %v533
        %v543 = vpack.c.b16 %v536, %v535
        %v544 = vpack.c.b16 %v538, %v537
        %v551 = vunpack.c.l.b16 %v503
        %v552 = vunpack.c.l.b16 %v504
        %v553 = vunpack.c.l.b16 %v505
        %v554 = vunpack.c.l.b16 %v506
        %v555 = vunpack.c.l.b16 %v507
        %v556 = vunpack.c.l.b16 %v508
        %v557 = vpack.c.b16 %v551, %v551
        %v558 = vpack.c.b16 %v552, %v552
        %v559 = vpack.c.b16 %v553, %v553
        %v560 = vpack.c.b16 %v554, %v554
        %v561 = vpack.c.b16 %v555, %v555
        %v562 = vpack.c.b16 %v556, %v556
        %v564 = vshrl.u32 %v539, 16
        %v566 = vshll.u32 %v539, 16
        %v568 = vrot.slane %v566, 1
        %v569 = vor.u32 %v564, %v568
        %v571 = vshll.u32 %v557, 16
        %v573 = vrot.slane %v571, 1
        %v574 = vsel %vm328, %v569, %v573
        %v576 = vshrl.u32 %v540, 16
        %v578 = vshll.u32 %v540, 16
        %v580 = vrot.slane %v578, 1
        %v581 = vor.u32 %v576, %v580
        %v583 = vshll.u32 %v558, 16
        %v585 = vrot.slane %v583, 1
        %v586 = vsel %vm328, %v581, %v585
        %v588 = vshrl.u32 %v541, 16
        %v590 = vshll.u32 %v541, 16
        %v592 = vrot.slane %v590, 1
        %v593 = vor.u32 %v588, %v592
        %v595 = vshll.u32 %v559, 16
        %v597 = vrot.slane %v595, 1
        %v598 = vsel %vm328, %v593, %v597
        %v600 = vshrl.u32 %v542, 16
        %v602 = vshll.u32 %v542, 16
        %v604 = vrot.slane %v602, 1
        %v605 = vor.u32 %v600, %v604
        %v607 = vshll.u32 %v560, 16
        %v609 = vrot.slane %v607, 1
        %v610 = vsel %vm328, %v605, %v609
        %v612 = vshrl.u32 %v543, 16
        %v614 = vshll.u32 %v543, 16
        %v616 = vrot.slane %v614, 1
        %v617 = vor.u32 %v612, %v616
        %v619 = vshll.u32 %v561, 16
        %v621 = vrot.slane %v619, 1
        %v622 = vsel %vm328, %v617, %v621
        %v624 = vshrl.u32 %v544, 16
        %v626 = vshll.u32 %v544, 16
        %v628 = vrot.slane %v626, 1
        %v629 = vor.u32 %v624, %v628
        %v631 = vshll.u32 %v562, 16
        %v633 = vrot.slane %v631, 1
        %v634 = vsel %vm328, %v629, %v633
        %635 = vrot.lane.b32.xlu0 %v574, 4
        %v636 = vpop.permute.xlu0 %635
        %637 = vrot.lane.b32.xlu0 %v586, 4
        %v638 = vpop.permute.xlu0 %637
        %639 = vrot.lane.b32.xlu0 %v598, 4
        %v640 = vpop.permute.xlu0 %639
        %641 = vrot.lane.b32.xlu0 %v610, 4
        %v642 = vpop.permute.xlu0 %641
        %643 = vrot.lane.b32.xlu0 %v622, 4
        %v644 = vpop.permute.xlu0 %643
        %645 = vrot.lane.b32.xlu0 %v634, 4
        %v646 = vpop.permute.xlu0 %645
        %v653 = vunpack.c.l.b16 %v509
        %v654 = vunpack.c.l.b16 %v510
        %v655 = vunpack.c.l.b16 %v511
        %v656 = vunpack.c.l.b16 %v512
        %v657 = vunpack.c.l.b16 %v513
        %v658 = vunpack.c.l.b16 %v514
        %v659 = vpack.c.b16 %v528, %v653
        %v660 = vpack.c.b16 %v530, %v654
        %v661 = vpack.c.b16 %v532, %v655
        %v662 = vpack.c.b16 %v534, %v656
        %v663 = vpack.c.b16 %v536, %v657
        %v664 = vpack.c.b16 %v538, %v658
        %v665 = vrot.slane %v659, 1
        %v666 = vrot.slane %v557, 1
        %v667 = vsel %vm431, %v665, %v666
        %v668 = vrot.slane %v660, 1
        %v669 = vrot.slane %v558, 1
        %v670 = vsel %vm431, %v668, %v669
        %v671 = vrot.slane %v661, 1
        %v672 = vrot.slane %v559, 1
        %v673 = vsel %vm431, %v671, %v672
        %v674 = vrot.slane %v662, 1
        %v675 = vrot.slane %v560, 1
        %v676 = vsel %vm431, %v674, %v675
        %v677 = vrot.slane %v663, 1
        %v678 = vrot.slane %v561, 1
        %v679 = vsel %vm431, %v677, %v678
        %v680 = vrot.slane %v664, 1
        %v681 = vrot.slane %v562, 1
        %v682 = vsel %vm431, %v680, %v681
        %683 = vrot.lane.b32.xlu0 %v667, 8
        %v684 = vpop.permute.xlu0 %683
        %685 = vrot.lane.b32.xlu0 %v670, 8
        %v686 = vpop.permute.xlu0 %685
        %687 = vrot.lane.b32.xlu0 %v673, 8
        %v688 = vpop.permute.xlu0 %687
        %689 = vrot.lane.b32.xlu0 %v676, 8
        %v690 = vpop.permute.xlu0 %689
        %691 = vrot.lane.b32.xlu0 %v679, 8
        %v692 = vpop.permute.xlu0 %691
        %693 = vrot.lane.b32.xlu0 %v682, 8
        %v694 = vpop.permute.xlu0 %693
        %v696 = vsel %vm462, %v539, %v636
        %v698 = vsel %vm462, %v540, %v638
        %v700 = vsel %vm462, %v541, %v640
        %v702 = vsel %vm462, %v542, %v642
        %v704 = vsel %vm462, %v543, %v644
        %v706 = vsel %vm462, %v544, %v646
        %v708 = vsel %vm475, %v696, %v684
        %v710 = vsel %vm475, %v698, %v686
        %v712 = vsel %vm475, %v700, %v688
        %v714 = vsel %vm475, %v702, %v690
        %v716 = vsel %vm475, %v704, %v692
        %v718 = vsel %vm475, %v706, %v694
        %s719 = scalar_lea.vmem %s248, 8
        %v720 = vld [vmem:[%s719] sm:$0xf]
        %v721 = vld [vmem:[%s719 + $0x4] sm:$0x3]
        %v724 = vunpack.c.l.b16 %v720
        %v725 = vunpack.c.l.b16 %v721
        %v726 = vpack.c.b16 %v725, %v724
        %vm727 = vcmask 97280
        %v728 = vsel %vm727, %v708, 0
        %v730 = vsel %vm727, %v710, 0
        %v732 = vsel %vm727, %v712, 0
        %v734 = vsel %vm727, %v714, 0
        %v736 = vsel %vm727, %v716, 0
        %v738 = vsel %vm727, %v718, 0
        %vm740 = vcmask 1045504
        %v742 = vsel %vm740, %v726, 0
        %744 = vmatprep.subr.bf16.mxu0 0
        %745 = vmatpush1.bf16.msra.mxu0 %v742
        %746 = vmatprep.subr.bf16.mxu0 0
        %747 = vmatpush1.bf16.msra.mxu0 0
        %748 = vmatprep.subr.bf16.mxu0 0
        %749 = vmatpush1.bf16.msra.mxu0 0
        %750 = vmatprep.subr.bf16.mxu0 0
        %751 = vmatpush1.bf16.msra.mxu0 0
        %752 = vmatprep.subr.bf16.mxu0 0
        %753 = vmatpush1.bf16.msra.mxu0 0
        %754 = vmatprep.subr.bf16.mxu0 0
        %755 = vmatpush1.bf16.msra.mxu0 0
        %756 = vmatprep.subr.bf16.mxu0 0
        %757 = vmatpush1.bf16.msra.mxu0 0
        %758 = vmatprep.subr.bf16.mxu0 0
        %759 = vmatpush1.bf16.msra.mxu0 0
        %760 = vmatprep.subr.bf16.mxu0 0
        %761 = vmatpush1.bf16.msra.mxu0 0
        %762 = vmatprep.subr.bf16.mxu0 0
        %763 = vmatpush1.bf16.msra.mxu0 0
        %764 = vmatprep.subr.bf16.mxu0 0
        %765 = vmatpush1.bf16.msra.mxu0 0
        %766 = vmatprep.subr.bf16.mxu0 0
        %767 = vmatpush1.bf16.msra.mxu0 0
        %768 = vmatprep.subr.bf16.mxu0 0
        %769 = vmatpush1.bf16.msra.mxu0 0
        %770 = vmatprep.subr.bf16.mxu0 0
        %771 = vmatpush1.bf16.msra.mxu0 0
        %772 = vmatprep.subr.bf16.mxu0 0
        %773 = vmatpush1.bf16.msra.mxu0 0
        %774 = vmatprep.subr.bf16.mxu0 0
        %775 = vmatpush1.bf16.msra.mxu0 0
        %776 = vmatprep.mubr.bf16.mxu0 0
        %777 = vmatmul.mubr.bf16.gmra.mrb[0].mxu0 %v728
        %v778 = vpop.f32.mrb[0].mxu0
        %v779 = vadd.f32 0.0, %v778
        %v780 = vpop.f32.mrb[0].mxu0
        %v781 = vpop.f32.mrb[0].mxu0
        %v782 = vadd.f32 0.0, %v781
        %v783 = vpop.f32.mrb[0].mxu0
        %784 = vmatprep.mubr.bf16.mxu0 0
        %785 = vmatmul.mubr.bf16.gmra.mrb[0].mxu0 %v730
        %v786 = vpop.f32.mrb[0].mxu0
        %v787 = vadd.f32 0.0, %v786
        %v788 = vpop.f32.mrb[0].mxu0
        %v789 = vpop.f32.mrb[0].mxu0
        %v790 = vadd.f32 0.0, %v789
        %v791 = vpop.f32.mrb[0].mxu0
        %792 = vmatprep.mubr.bf16.mxu0 0
        %793 = vmatmul.mubr.bf16.gmra.mrb[0].mxu0 %v732
        %v794 = vpop.f32.mrb[0].mxu0
        %v795 = vadd.f32 0.0, %v794
        %v796 = vpop.f32.mrb[0].mxu0
        %v797 = vpop.f32.mrb[0].mxu0
        %v798 = vadd.f32 0.0, %v797
        %v799 = vpop.f32.mrb[0].mxu0
        %800 = vmatprep.mubr.bf16.mxu0 0
        %801 = vmatmul.mubr.bf16.gmra.mrb[0].mxu0 %v734
        %v802 = vpop.f32.mrb[0].mxu0
        %v803 = vadd.f32 0.0, %v802
        %v804 = vpop.f32.mrb[0].mxu0
        %v805 = vpop.f32.mrb[0].mxu0
        %v806 = vadd.f32 0.0, %v805
        %v807 = vpop.f32.mrb[0].mxu0
        %808 = vmatprep.mubr.bf16.mxu0 0
        %809 = vmatmul.mubr.bf16.gmra.mrb[0].mxu0 %v736
        %v810 = vpop.f32.mrb[0].mxu0
        %v811 = vadd.f32 0.0, %v810
        %v812 = vpop.f32.mrb[0].mxu0
        %v813 = vpop.f32.mrb[0].mxu0
        %v814 = vadd.f32 0.0, %v813
        %v815 = vpop.f32.mrb[0].mxu0
        %816 = vmatprep.mubr.bf16.mxu0 0
        %817 = vmatmul.mubr.bf16.gmra.mrb[0].mxu0 %v738
        %v818 = vpop.f32.mrb[0].mxu0
        %v819 = vadd.f32 0.0, %v818
        %v820 = vpop.f32.mrb[0].mxu0
        %v821 = vpop.f32.mrb[0].mxu0
        %v822 = vadd.f32 0.0, %v821
        %v823 = vpop.f32.mrb[0].mxu0
        %824 = vdwg.mxu0
        %v827 = vunpack.c.l.b16 %v488
        %v828 = vunpack.c.l.b16 %v489
        %v829 = vpack.c.b16 %v828, %v827
        %v830 = vsel %vm727, %v477, 0
        %v832 = vsel %vm727, %v479, 0
        %v834 = vsel %vm727, %v481, 0
        %v836 = vsel %vm727, %v483, 0
        %v838 = vsel %vm727, %v485, 0
        %v840 = vsel %vm727, %v487, 0
        %v843 = vsel %vm740, %v829, 0
        %845 = vmatprep.subr.bf16.mxu0 0
        %846 = vmatpush1.bf16.msra.mxu0 %v843
        %847 = vmatprep.subr.bf16.mxu0 0
        %848 = vmatpush1.bf16.msra.mxu0 0
        %849 = vmatprep.subr.bf16.mxu0 0
        %850 = vmatpush1.bf16.msra.mxu0 0
        %851 = vmatprep.subr.bf16.mxu0 0
        %852 = vmatpush1.bf16.msra.mxu0 0
        %853 = vmatprep.subr.bf16.mxu0 0
        %854 = vmatpush1.bf16.msra.mxu0 0
        %855 = vmatprep.subr.bf16.mxu0 0
        %856 = vmatpush1.bf16.msra.mxu0 0
        %857 = vmatprep.subr.bf16.mxu0 0
        %858 = vmatpush1.bf16.msra.mxu0 0
        %859 = vmatprep.subr.bf16.mxu0 0
        %860 = vmatpush1.bf16.msra.mxu0 0
        %861 = vmatprep.subr.bf16.mxu0 0
        %862 = vmatpush1.bf16.msra.mxu0 0
        %863 = vmatprep.subr.bf16.mxu0 0
        %864 = vmatpush1.bf16.msra.mxu0 0
        %865 = vmatprep.subr.bf16.mxu0 0
        %866 = vmatpush1.bf16.msra.mxu0 0
        %867 = vmatprep.subr.bf16.mxu0 0
        %868 = vmatpush1.bf16.msra.mxu0 0
        %869 = vmatprep.subr.bf16.mxu0 0
        %870 = vmatpush1.bf16.msra.mxu0 0
        %871 = vmatprep.subr.bf16.mxu0 0
        %872 = vmatpush1.bf16.msra.mxu0 0
        %873 = vmatprep.subr.bf16.mxu0 0
        %874 = vmatpush1.bf16.msra.mxu0 0
        %875 = vmatprep.subr.bf16.mxu0 0
        %876 = vmatpush1.bf16.msra.mxu0 0
        %877 = vmatprep.mubr.bf16.mxu0 0
        %878 = vmatmul.mubr.bf16.gmra.mrb[0].mxu0 %v830
        %v879 = vpop.f32.mrb[0].mxu0
        %v880 = vadd.f32 %v779, %v879
        %v881 = vpop.f32.mrb[0].mxu0
        %v882 = vpop.f32.mrb[0].mxu0
        %v883 = vadd.f32 %v782, %v882
        %v884 = vpop.f32.mrb[0].mxu0
        %885 = vmatprep.mubr.bf16.mxu0 0
        %886 = vmatmul.mubr.bf16.gmra.mrb[0].mxu0 %v832
        %v887 = vpop.f32.mrb[0].mxu0
        %v888 = vadd.f32 %v787, %v887
        %v889 = vpop.f32.mrb[0].mxu0
        %v890 = vpop.f32.mrb[0].mxu0
        %v891 = vadd.f32 %v790, %v890
        %v892 = vpop.f32.mrb[0].mxu0
        %893 = vmatprep.mubr.bf16.mxu0 0
        %894 = vmatmul.mubr.bf16.gmra.mrb[0].mxu0 %v834
        %v895 = vpop.f32.mrb[0].mxu0
        %v896 = vadd.f32 %v795, %v895
        %v897 = vpop.f32.mrb[0].mxu0
        %v898 = vpop.f32.mrb[0].mxu0
        %v899 = vadd.f32 %v798, %v898
        %v900 = vpop.f32.mrb[0].mxu0
        %901 = vmatprep.mubr.bf16.mxu0 0
        %902 = vmatmul.mubr.bf16.gmra.mrb[0].mxu0 %v836
        %v903 = vpop.f32.mrb[0].mxu0
        %v904 = vadd.f32 %v803, %v903
        %v905 = vpop.f32.mrb[0].mxu0
        %v906 = vpop.f32.mrb[0].mxu0
        %v907 = vadd.f32 %v806, %v906
        %v908 = vpop.f32.mrb[0].mxu0
        %909 = vmatprep.mubr.bf16.mxu0 0
        %910 = vmatmul.mubr.bf16.gmra.mrb[0].mxu0 %v838
        %v911 = vpop.f32.mrb[0].mxu0
        %v912 = vadd.f32 %v811, %v911
        %v913 = vpop.f32.mrb[0].mxu0
        %v914 = vpop.f32.mrb[0].mxu0
        %v915 = vadd.f32 %v814, %v914
        %v916 = vpop.f32.mrb[0].mxu0
        %917 = vmatprep.mubr.bf16.mxu0 0
        %918 = vmatmul.mubr.bf16.gmra.mrb[0].mxu0 %v840
        %v919 = vpop.f32.mrb[0].mxu0
        %v920 = vadd.f32 %v819, %v919
        %v921 = vpop.f32.mrb[0].mxu0
        %v922 = vpop.f32.mrb[0].mxu0
        %v923 = vadd.f32 %v822, %v922
        %v924 = vpop.f32.mrb[0].mxu0
        %925 = vdwg.mxu0
        %s926 = scalar_lea.vmem %s244, 24
        %v927 = vld [vmem:[%s926] sm:$0xf]
        %v928 = vld [vmem:[%s926 + $0x4] sm:$0xf]
        %v929 = vld [vmem:[%s926 + $0xc] sm:$0xf]
        %v930 = vld [vmem:[%s926 + $0x10] sm:$0xf]
        %v931 = vld [vmem:[%s926 + $0x18] sm:$0xf]
        %v932 = vld [vmem:[%s926 + $0x1c] sm:$0xf]
        %v933 = vld [vmem:[%s926 + $0x24] sm:$0xf]
        %v934 = vld [vmem:[%s926 + $0x28] sm:$0xf]
        %v935 = vld [vmem:[%s926 + $0x30] sm:$0xf]
        %v936 = vld [vmem:[%s926 + $0x34] sm:$0xf]
        %v937 = vld [vmem:[%s926 + $0x3c] sm:$0xf]
        %v938 = vld [vmem:[%s926 + $0x40] sm:$0xf]
        %v939 = vld [vmem:[%s926 + $0x8] sm:$0x1]
        %v940 = vld [vmem:[%s926 + $0x14] sm:$0x1]
        %v941 = vld [vmem:[%s926 + $0x20] sm:$0x1]
        %v942 = vld [vmem:[%s926 + $0x2c] sm:$0x1]
        %v943 = vld [vmem:[%s926 + $0x38] sm:$0x1]
        %v944 = vld [vmem:[%s926 + $0x44] sm:$0x1]
        %v945 = vld [vmem:[%s926] sm:$0xe]
        %v946 = vld [vmem:[%s926 + $0xc] sm:$0xe]
        %v947 = vld [vmem:[%s926 + $0x18] sm:$0xe]
        %v948 = vld [vmem:[%s926 + $0x24] sm:$0xe]
        %v949 = vld [vmem:[%s926 + $0x30] sm:$0xe]
        %v950 = vld [vmem:[%s926 + $0x3c] sm:$0xe]
        %v963 = vunpack.c.l.b16 %v927
        %v964 = vunpack.c.l.b16 %v928
        %v965 = vunpack.c.l.b16 %v929
        %v966 = vunpack.c.l.b16 %v930
        %v967 = vunpack.c.l.b16 %v931
        %v968 = vunpack.c.l.b16 %v932
        %v969 = vunpack.c.l.b16 %v933
        %v970 = vunpack.c.l.b16 %v934
        %v971 = vunpack.c.l.b16 %v935
        %v972 = vunpack.c.l.b16 %v936
        %v973 = vunpack.c.l.b16 %v937
        %v974 = vunpack.c.l.b16 %v938
        %v975 = vpack.c.b16 %v964, %v963
        %v976 = vpack.c.b16 %v966, %v965
        %v977 = vpack.c.b16 %v968, %v967
        %v978 = vpack.c.b16 %v970, %v969
        %v979 = vpack.c.b16 %v972, %v971
        %v980 = vpack.c.b16 %v974, %v973
        %v987 = vunpack.c.l.b16 %v939
        %v988 = vunpack.c.l.b16 %v940
        %v989 = vunpack.c.l.b16 %v941
        %v990 = vunpack.c.l.b16 %v942
        %v991 = vunpack.c.l.b16 %v943
        %v992 = vunpack.c.l.b16 %v944
        %v993 = vpack.c.b16 %v987, %v987
        %v994 = vpack.c.b16 %v988, %v988
        %v995 = vpack.c.b16 %v989, %v989
        %v996 = vpack.c.b16 %v990, %v990
        %v997 = vpack.c.b16 %v991, %v991
        %v998 = vpack.c.b16 %v992, %v992
        %v1000 = vshrl.u32 %v975, 16
        %v1002 = vshll.u32 %v975, 16
        %v1004 = vrot.slane %v1002, 1
        %v1005 = vor.u32 %v1000, %v1004
        %v1007 = vshll.u32 %v993, 16
        %v1009 = vrot.slane %v1007, 1
        %v1010 = vsel %vm328, %v1005, %v1009
        %v1012 = vshrl.u32 %v976, 16
        %v1014 = vshll.u32 %v976, 16
        %v1016 = vrot.slane %v1014, 1
        %v1017 = vor.u32 %v1012, %v1016
        %v1019 = vshll.u32 %v994, 16
        %v1021 = vrot.slane %v1019, 1
        %v1022 = vsel %vm328, %v1017, %v1021
        %v1024 = vshrl.u32 %v977, 16
        %v1026 = vshll.u32 %v977, 16
        %v1028 = vrot.slane %v1026, 1
        %v1029 = vor.u32 %v1024, %v1028
        %v1031 = vshll.u32 %v995, 16
        %v1033 = vrot.slane %v1031, 1
        %v1034 = vsel %vm328, %v1029, %v1033
        %v1036 = vshrl.u32 %v978, 16
        %v1038 = vshll.u32 %v978, 16
        %v1040 = vrot.slane %v1038, 1
        %v1041 = vor.u32 %v1036, %v1040
        %v1043 = vshll.u32 %v996, 16
        %v1045 = vrot.slane %v1043, 1
        %v1046 = vsel %vm328, %v1041, %v1045
        %v1048 = vshrl.u32 %v979, 16
        %v1050 = vshll.u32 %v979, 16
        %v1052 = vrot.slane %v1050, 1
        %v1053 = vor.u32 %v1048, %v1052
        %v1055 = vshll.u32 %v997, 16
        %v1057 = vrot.slane %v1055, 1
        %v1058 = vsel %vm328, %v1053, %v1057
        %v1060 = vshrl.u32 %v980, 16
        %v1062 = vshll.u32 %v980, 16
        %v1064 = vrot.slane %v1062, 1
        %v1065 = vor.u32 %v1060, %v1064
        %v1067 = vshll.u32 %v998, 16
        %v1069 = vrot.slane %v1067, 1
        %v1070 = vsel %vm328, %v1065, %v1069
        %1071 = vrot.lane.b32.xlu0 %v1010, 4
        %v1072 = vpop.permute.xlu0 %1071
        %1073 = vrot.lane.b32.xlu0 %v1022, 4
        %v1074 = vpop.permute.xlu0 %1073
        %1075 = vrot.lane.b32.xlu0 %v1034, 4
        %v1076 = vpop.permute.xlu0 %1075
        %1077 = vrot.lane.b32.xlu0 %v1046, 4
        %v1078 = vpop.permute.xlu0 %1077
        %1079 = vrot.lane.b32.xlu0 %v1058, 4
        %v1080 = vpop.permute.xlu0 %1079
        %1081 = vrot.lane.b32.xlu0 %v1070, 4
        %v1082 = vpop.permute.xlu0 %1081
        %v1089 = vunpack.c.l.b16 %v945
        %v1090 = vunpack.c.l.b16 %v946
        %v1091 = vunpack.c.l.b16 %v947
        %v1092 = vunpack.c.l.b16 %v948
        %v1093 = vunpack.c.l.b16 %v949
        %v1094 = vunpack.c.l.b16 %v950
        %v1095 = vpack.c.b16 %v964, %v1089
        %v1096 = vpack.c.b16 %v966, %v1090
        %v1097 = vpack.c.b16 %v968, %v1091
        %v1098 = vpack.c.b16 %v970, %v1092
        %v1099 = vpack.c.b16 %v972, %v1093
        %v1100 = vpack.c.b16 %v974, %v1094
        %v1101 = vrot.slane %v1095, 1
        %v1102 = vrot.slane %v993, 1
        %v1103 = vsel %vm431, %v1101, %v1102
        %v1104 = vrot.slane %v1096, 1
        %v1105 = vrot.slane %v994, 1
        %v1106 = vsel %vm431, %v1104, %v1105
        %v1107 = vrot.slane %v1097, 1
        %v1108 = vrot.slane %v995, 1
        %v1109 = vsel %vm431, %v1107, %v1108
        %v1110 = vrot.slane %v1098, 1
        %v1111 = vrot.slane %v996, 1
        %v1112 = vsel %vm431, %v1110, %v1111
        %v1113 = vrot.slane %v1099, 1
        %v1114 = vrot.slane %v997, 1
        %v1115 = vsel %vm431, %v1113, %v1114
        %v1116 = vrot.slane %v1100, 1
        %v1117 = vrot.slane %v998, 1
        %v1118 = vsel %vm431, %v1116, %v1117
        %1119 = vrot.lane.b32.xlu0 %v1103, 8
        %v1120 = vpop.permute.xlu0 %1119
        %1121 = vrot.lane.b32.xlu0 %v1106, 8
        %v1122 = vpop.permute.xlu0 %1121
        %1123 = vrot.lane.b32.xlu0 %v1109, 8
        %v1124 = vpop.permute.xlu0 %1123
        %1125 = vrot.lane.b32.xlu0 %v1112, 8
        %v1126 = vpop.permute.xlu0 %1125
        %1127 = vrot.lane.b32.xlu0 %v1115, 8
        %v1128 = vpop.permute.xlu0 %1127
        %1129 = vrot.lane.b32.xlu0 %v1118, 8
        %v1130 = vpop.permute.xlu0 %1129
        %v1132 = vsel %vm462, %v975, %v1072
        %v1134 = vsel %vm462, %v976, %v1074
        %v1136 = vsel %vm462, %v977, %v1076
        %v1138 = vsel %vm462, %v978, %v1078
        %v1140 = vsel %vm462, %v979, %v1080
        %v1142 = vsel %vm462, %v980, %v1082
        %v1144 = vsel %vm475, %v1132, %v1120
        %v1146 = vsel %vm475, %v1134, %v1122
        %v1148 = vsel %vm475, %v1136, %v1124
        %v1150 = vsel %vm475, %v1138, %v1126
        %v1152 = vsel %vm475, %v1140, %v1128
        %v1154 = vsel %vm475, %v1142, %v1130
        %s1155 = scalar_lea.vmem %s248, 16
        %v1156 = vld [vmem:[%s1155] sm:$0xf]
        %v1157 = vld [vmem:[%s1155 + $0x4] sm:$0x3]
        %v1160 = vunpack.c.l.b16 %v1156
        %v1161 = vunpack.c.l.b16 %v1157
        %v1162 = vpack.c.b16 %v1161, %v1160
        %v1163 = vsel %vm727, %v1144, 0
        %v1165 = vsel %vm727, %v1146, 0
        %v1167 = vsel %vm727, %v1148, 0
        %v1169 = vsel %vm727, %v1150, 0
        %v1171 = vsel %vm727, %v1152, 0
        %v1173 = vsel %vm727, %v1154, 0
        %v1176 = vsel %vm740, %v1162, 0
        %1178 = vmatprep.subr.bf16.mxu0 0
        %1179 = vmatpush1.bf16.msra.mxu0 %v1176
        %1180 = vmatprep.subr.bf16.mxu0 0
        %1181 = vmatpush1.bf16.msra.mxu0 0
        %1182 = vmatprep.subr.bf16.mxu0 0
        %1183 = vmatpush1.bf16.msra.mxu0 0
        %1184 = vmatprep.subr.bf16.mxu0 0
        %1185 = vmatpush1.bf16.msra.mxu0 0
        %1186 = vmatprep.subr.bf16.mxu0 0
        %1187 = vmatpush1.bf16.msra.mxu0 0
        %1188 = vmatprep.subr.bf16.mxu0 0
        %1189 = vmatpush1.bf16.msra.mxu0 0
        %1190 = vmatprep.subr.bf16.mxu0 0
        %1191 = vmatpush1.bf16.msra.mxu0 0
        %1192 = vmatprep.subr.bf16.mxu0 0
        %1193 = vmatpush1.bf16.msra.mxu0 0
        %1194 = vmatprep.subr.bf16.mxu0 0
        %1195 = vmatpush1.bf16.msra.mxu0 0
        %1196 = vmatprep.subr.bf16.mxu0 0
        %1197 = vmatpush1.bf16.msra.mxu0 0
        %1198 = vmatprep.subr.bf16.mxu0 0
        %1199 = vmatpush1.bf16.msra.mxu0 0
        %1200 = vmatprep.subr.bf16.mxu0 0
        %1201 = vmatpush1.bf16.msra.mxu0 0
        %1202 = vmatprep.subr.bf16.mxu0 0
        %1203 = vmatpush1.bf16.msra.mxu0 0
        %1204 = vmatprep.subr.bf16.mxu0 0
        %1205 = vmatpush1.bf16.msra.mxu0 0
        %1206 = vmatprep.subr.bf16.mxu0 0
        %1207 = vmatpush1.bf16.msra.mxu0 0
        %1208 = vmatprep.subr.bf16.mxu0 0
        %1209 = vmatpush1.bf16.msra.mxu0 0
        %1210 = vmatprep.mubr.bf16.mxu0 0
        %1211 = vmatmul.mubr.bf16.gmra.mrb[0].mxu0 %v1163
        %v1212 = vpop.f32.mrb[0].mxu0
        %v1213 = vadd.f32 0.0, %v1212
        %v1214 = vpop.f32.mrb[0].mxu0
        %v1215 = vpop.f32.mrb[0].mxu0
        %v1216 = vadd.f32 0.0, %v1215
        %v1217 = vpop.f32.mrb[0].mxu0
        %1218 = vmatprep.mubr.bf16.mxu0 0
        %1219 = vmatmul.mubr.bf16.gmra.mrb[0].mxu0 %v1165
        %v1220 = vpop.f32.mrb[0].mxu0
        %v1221 = vadd.f32 0.0, %v1220
        %v1222 = vpop.f32.mrb[0].mxu0
        %v1223 = vpop.f32.mrb[0].mxu0
        %v1224 = vadd.f32 0.0, %v1223
        %v1225 = vpop.f32.mrb[0].mxu0
        %1226 = vmatprep.mubr.bf16.mxu0 0
        %1227 = vmatmul.mubr.bf16.gmra.mrb[0].mxu0 %v1167
        %v1228 = vpop.f32.mrb[0].mxu0
        %v1229 = vadd.f32 0.0, %v1228
        %v1230 = vpop.f32.mrb[0].mxu0
        %v1231 = vpop.f32.mrb[0].mxu0
        %v1232 = vadd.f32 0.0, %v1231
        %v1233 = vpop.f32.mrb[0].mxu0
        %1234 = vmatprep.mubr.bf16.mxu0 0
        %1235 = vmatmul.mubr.bf16.gmra.mrb[0].mxu0 %v1169
        %v1236 = vpop.f32.mrb[0].mxu0
        %v1237 = vadd.f32 0.0, %v1236
        %v1238 = vpop.f32.mrb[0].mxu0
        %v1239 = vpop.f32.mrb[0].mxu0
        %v1240 = vadd.f32 0.0, %v1239
        %v1241 = vpop.f32.mrb[0].mxu0
        %1242 = vmatprep.mubr.bf16.mxu0 0
        %1243 = vmatmul.mubr.bf16.gmra.mrb[0].mxu0 %v1171
        %v1244 = vpop.f32.mrb[0].mxu0
        %v1245 = vadd.f32 0.0, %v1244
        %v1246 = vpop.f32.mrb[0].mxu0
        %v1247 = vpop.f32.mrb[0].mxu0
        %v1248 = vadd.f32 0.0, %v1247
        %v1249 = vpop.f32.mrb[0].mxu0
        %1250 = vmatprep.mubr.bf16.mxu0 0
        %1251 = vmatmul.mubr.bf16.gmra.mrb[0].mxu0 %v1173
        %v1252 = vpop.f32.mrb[0].mxu0
        %v1253 = vadd.f32 0.0, %v1252
        %v1254 = vpop.f32.mrb[0].mxu0
        %v1255 = vpop.f32.mrb[0].mxu0
        %v1256 = vadd.f32 0.0, %v1255
        %v1257 = vpop.f32.mrb[0].mxu0
        %1258 = vdwg.mxu0
        %v1259 = vadd.f32 %v880, %v1213
        %v1260 = vadd.f32 %v883, %v1216
        %v1261 = vadd.f32 %v888, %v1221
        %v1262 = vadd.f32 %v891, %v1224
        %v1263 = vadd.f32 %v896, %v1229
        %v1264 = vadd.f32 %v899, %v1232
        %v1265 = vadd.f32 %v904, %v1237
        %v1266 = vadd.f32 %v907, %v1240
        %v1267 = vadd.f32 %v912, %v1245
        %v1268 = vadd.f32 %v915, %v1248
        %v1269 = vadd.f32 %v920, %v1253
        %v1270 = vadd.f32 %v923, %v1256
        %v1271 = vld [vmem:[%s251] sm:$0x1]
        %v1273 = vlaneseq
        %v1274 = vshrl.u32 %v1273, 7
        %v1275 = vsub.s32 0, %v1274
        %v1276 = vrot.slane %v1271, %v1275
        %v1278 = vmul.f32 %v1259, %v1276
        %v1279 = vmul.f32 %v1260, %v1276
        %v1280 = vmul.f32 %v1261, %v1276
        %v1281 = vmul.f32 %v1262, %v1276
        %v1282 = vmul.f32 %v1263, %v1276
        %v1283 = vmul.f32 %v1264, %v1276
        %v1284 = vmul.f32 %v1265, %v1276
        %v1285 = vmul.f32 %v1266, %v1276
        %v1286 = vmul.f32 %v1267, %v1276
        %v1287 = vmul.f32 %v1268, %v1276
        %v1288 = vmul.f32 %v1269, %v1276
        %v1289 = vmul.f32 %v1270, %v1276
        %v1290 = vld [vmem:[%s254] sm:$0x1]
        %v1292 = vlaneseq
        %v1293 = vshrl.u32 %v1292, 7
        %v1294 = vsub.s32 0, %v1293
        %v1295 = vrot.slane %v1290, %v1294
        %v1297 = vadd.f32 %v1278, %v1295
        %v1298 = vadd.f32 %v1279, %v1295
        %v1299 = vadd.f32 %v1280, %v1295
        %v1300 = vadd.f32 %v1281, %v1295
        %v1301 = vadd.f32 %v1282, %v1295
        %v1302 = vadd.f32 %v1283, %v1295
        %v1303 = vadd.f32 %v1284, %v1295
        %v1304 = vadd.f32 %v1285, %v1295
        %v1305 = vadd.f32 %v1286, %v1295
        %v1306 = vadd.f32 %v1287, %v1295
        %v1307 = vadd.f32 %v1288, %v1295
        %v1308 = vadd.f32 %v1289, %v1295
        %v1309 = vxor.u32 %v1297, 2147483648
        %v1310 = vxor.u32 %v1298, 2147483648
        %v1311 = vxor.u32 %v1299, 2147483648
        %v1312 = vxor.u32 %v1300, 2147483648
        %v1313 = vxor.u32 %v1301, 2147483648
        %v1314 = vxor.u32 %v1302, 2147483648
        %v1315 = vxor.u32 %v1303, 2147483648
        %v1316 = vxor.u32 %v1304, 2147483648
        %v1317 = vxor.u32 %v1305, 2147483648
        %v1318 = vxor.u32 %v1306, 2147483648
        %v1319 = vxor.u32 %v1307, 2147483648
        %v1320 = vxor.u32 %v1308, 2147483648
        %v1321 = vmul.f32 %v1309, 1.442695
        %v1322 = vpow.pop %v1321
        %v1323 = vmul.f32 %v1310, 1.442695
        %v1324 = vpow.pop %v1323
        %v1325 = vmul.f32 %v1311, 1.442695
        %v1326 = vpow.pop %v1325
        %v1327 = vmul.f32 %v1312, 1.442695
        %v1328 = vpow.pop %v1327
        %v1329 = vmul.f32 %v1313, 1.442695
        %v1330 = vpow.pop %v1329
        %v1331 = vmul.f32 %v1314, 1.442695
        %v1332 = vpow.pop %v1331
        %v1333 = vmul.f32 %v1315, 1.442695
        %v1334 = vpow.pop %v1333
        %v1335 = vmul.f32 %v1316, 1.442695
        %v1336 = vpow.pop %v1335
        %v1337 = vmul.f32 %v1317, 1.442695
        %v1338 = vpow.pop %v1337
        %v1339 = vmul.f32 %v1318, 1.442695
        %v1340 = vpow.pop %v1339
        %v1341 = vmul.f32 %v1319, 1.442695
        %v1342 = vpow.pop %v1341
        %v1343 = vmul.f32 %v1320, 1.442695
        %v1344 = vpow.pop %v1343
        %v1345 = vadd.f32 %v1322, 1.0
        %v1346 = vadd.f32 %v1324, 1.0
        %v1347 = vadd.f32 %v1326, 1.0
        %v1348 = vadd.f32 %v1328, 1.0
        %v1349 = vadd.f32 %v1330, 1.0
        %v1350 = vadd.f32 %v1332, 1.0
        %v1351 = vadd.f32 %v1334, 1.0
        %v1352 = vadd.f32 %v1336, 1.0
        %v1353 = vadd.f32 %v1338, 1.0
        %v1354 = vadd.f32 %v1340, 1.0
        %v1355 = vadd.f32 %v1342, 1.0
        %v1356 = vadd.f32 %v1344, 1.0
        %v1357 = vrcp.pop %v1345
        %v1358 = vmul.f32 1.0, %v1357
        %v1359 = vrcp.pop %v1346
        %v1360 = vmul.f32 1.0, %v1359
        %v1361 = vrcp.pop %v1347
        %v1362 = vmul.f32 1.0, %v1361
        %v1363 = vrcp.pop %v1348
        %v1364 = vmul.f32 1.0, %v1363
        %v1365 = vrcp.pop %v1349
        %v1366 = vmul.f32 1.0, %v1365
        %v1367 = vrcp.pop %v1350
        %v1368 = vmul.f32 1.0, %v1367
        %v1369 = vrcp.pop %v1351
        %v1370 = vmul.f32 1.0, %v1369
        %v1371 = vrcp.pop %v1352
        %v1372 = vmul.f32 1.0, %v1371
        %v1373 = vrcp.pop %v1353
        %v1374 = vmul.f32 1.0, %v1373
        %v1375 = vrcp.pop %v1354
        %v1376 = vmul.f32 1.0, %v1375
        %v1377 = vrcp.pop %v1355
        %v1378 = vmul.f32 1.0, %v1377
        %v1379 = vrcp.pop %v1356
        %v1380 = vmul.f32 1.0, %v1379
        %v1381 = vmul.f32 %v1297, %v1358
        %v1382 = vmul.f32 %v1298, %v1360
        %v1383 = vmul.f32 %v1299, %v1362
        %v1384 = vmul.f32 %v1300, %v1364
        %v1385 = vmul.f32 %v1301, %v1366
        %v1386 = vmul.f32 %v1302, %v1368
        %v1387 = vmul.f32 %v1303, %v1370
        %v1388 = vmul.f32 %v1304, %v1372
        %v1389 = vmul.f32 %v1305, %v1374
        %v1390 = vmul.f32 %v1306, %v1376
        %v1391 = vmul.f32 %v1307, %v1378
        %v1392 = vmul.f32 %v1308, %v1380
        %v1393 = vpack.c.bf16 %v1382, %v1381
        %v1394 = vpack.c.bf16 %v1384, %v1383
        %v1395 = vpack.c.bf16 %v1386, %v1385
        %v1396 = vpack.c.bf16 %v1388, %v1387
        %v1397 = vpack.c.bf16 %v1390, %v1389
        %v1398 = vpack.c.bf16 %v1392, %v1391
        %v1405 = vunpack.c.l.b16 %v1393
        %v1406 = vunpack.c.h.b16 %v1393
        %v1407 = vunpack.c.l.b16 %v1394
        %v1408 = vunpack.c.h.b16 %v1394
        %v1409 = vunpack.c.l.b16 %v1395
        %v1410 = vunpack.c.h.b16 %v1395
        %v1411 = vunpack.c.l.b16 %v1396
        %v1412 = vunpack.c.h.b16 %v1396
        %v1413 = vunpack.c.l.b16 %v1397
        %v1414 = vunpack.c.h.b16 %v1397
        %v1415 = vunpack.c.l.b16 %v1398
        %v1416 = vunpack.c.h.b16 %v1398
        %v1417 = vpack.c.b16 %v1405, %v1405
        %v1418 = vpack.c.b16 %v1406, %v1406
        %v1419 = vpack.c.b16 %v1407, %v1407
        %v1420 = vpack.c.b16 %v1408, %v1408
        %v1421 = vpack.c.b16 %v1409, %v1409
        %v1422 = vpack.c.b16 %v1410, %v1410
        %v1423 = vpack.c.b16 %v1411, %v1411
        %v1424 = vpack.c.b16 %v1412, %v1412
        %v1425 = vpack.c.b16 %v1413, %v1413
        %v1426 = vpack.c.b16 %v1414, %v1414
        %v1427 = vpack.c.b16 %v1415, %v1415
        %v1428 = vpack.c.b16 %v1416, %v1416
        %1441 = vst [vmem:[%s239] sm:$0xf] %v1417
        %1442 = vst [vmem:[%s239 + $0x4] sm:$0xf] %v1418
        %1443 = vst [vmem:[%s239 + $0x8] sm:$0xf] %v1419
        %1444 = vst [vmem:[%s239 + $0xc] sm:$0xf] %v1420
        %1445 = vst [vmem:[%s239 + $0x10] sm:$0xf] %v1421
        %1446 = vst [vmem:[%s239 + $0x14] sm:$0xf] %v1422
        %1447 = vst [vmem:[%s239 + $0x18] sm:$0xf] %v1423
        %1448 = vst [vmem:[%s239 + $0x1c] sm:$0xf] %v1424
        %1449 = vst [vmem:[%s239 + $0x20] sm:$0xf] %v1425
        %1450 = vst [vmem:[%s239 + $0x24] sm:$0xf] %v1426
        %1451 = vst [vmem:[%s239 + $0x28] sm:$0xf] %v1427
        %1452 = vst [vmem:[%s239 + $0x2c] sm:$0xf] %v1428
        %s1453 = sand.u32 %s144, 1
        %s1454 = scalar_lea.sflag [#allocation3], %s1453
        %s1455 = sand.u32 %s144, 1
        %s1456 = smul.addr %s1455, 48
        %s1457 = scalar_lea.vmem [#allocation2], %s1456
        // Predicated region
        $region37: #{tpu_custom_call.1} parent=35 // pred_check
          %p1458 = pneg %p154
        $region38: #{tpu_custom_call.1} parent=35 // pred_check_branch
          %1460 = sbr.rel (%p1458) target = $region40
        $region39: #{tpu_custom_call.1} parent=35 // pred_region
          %s1462 = ssub.s32 768, 768
          %1463 = vsyncadd %s1454, %s1462
          %s1464 = smul.addr %s23, 12
          %s1465 = sadd.s32 %s22, %s1464
          %s1466 = smul.addr %s1465, 64
          %s1467 = scalar_lea.hbm %s4, %s1466
          %s1468 = sshll.u32 %s1457, 4
          %s1469 = int_to_ptr.vmem [resolvable:$true] %s1468
          %1474 = dma.vmem_to_hbm [thread:$0]  %s1469, 768, %s1467, %s1454, 64, 64, 4
        $region40: #{tpu_custom_call.1} parent=35 // pred_fallthru
          _
      $region36: #{tpu_custom_call.1} parent=5 // pred_fallthru
        _
      %p1475 = scmp.le.s32.totalorder 2, %s13
      // Predicated region
      $region41: #{tpu_custom_call.1} parent=5 // pred_check
        %p1476 = pneg %p1475
      $region42: #{tpu_custom_call.1} parent=5 // pred_check_branch
        %1478 = sbr.rel (%p1476) target = $region44
      $region43: #{tpu_custom_call.1} parent=5 // pred_region
        %s1479 = ssub.s32 %s13, 2
        // Predicated region
        $region45: #{tpu_custom_call.1} parent=43 // pred_check
          %p1480 = pneg %p160
        $region46: #{tpu_custom_call.1} parent=43 // pred_check_branch
          %1482 = sbr.rel (%p1480) target = $region48
        $region47: #{tpu_custom_call.1} parent=43 // pred_region
          %s1483 = sand.u32 %s145, 1
          %s1484 = scalar_lea.sflag [#allocation3], %s1483
          %s1485 = sand.u32 %s145, 1
          %s1486 = smul.addr %s1485, 48
          %s1487 = scalar_lea.vmem [#allocation2], %s1486
          %1488 = dma.done %s1484, 768
        $region48: #{tpu_custom_call.1} parent=43 // pred_fallthru
          _
      $region44: #{tpu_custom_call.1} parent=5 // pred_fallthru
        _
    $region6: #{tpu_custom_call.1} parent=1 // loop_footer
      %s17 = sadd.s32 1, %s13
    $region7: #{tpu_custom_call.1} parent=1 // loop_footer_branch
      %12 = sbr.rel target = $region3
    $region8: #{tpu_custom_call.1} parent=1 // loop_exit
      _
    %1489 = vsyncpa [#allocation3], 1
    %s1490 = scalar_lea.sflag [#allocation3], 1
    %1491 = vsyncpa %s1490, 1

</llo_original>
